<compile_context>
chip_gen: v6e
topology: v6e:2x2x1
jax: 0.10.0
libtpu: 0.0.40
codegen_flags: <defaults>
</compile_context>

<pallas_src>
import jax
import jax.numpy as jnp
from jax.experimental import pallas as pl
from jax.experimental.pallas import tpu as pltpu


def _nbytes(shape, dtype):
    n = 1
    for s in shape:
        n *= int(s)
    return n * jnp.dtype(dtype).itemsize


def _vmem_limit(block_bytes, scratch_bytes=0):
    # 2x for the double-buffered pipeline + slack; floor/cap keep it valid on v5e/v6e/v7x.
    est = 2 * sum(block_bytes) + scratch_bytes + (2 << 20)
    return int(min(max(est, 4 << 20), 48 << 20))


def _pick_row_block(H, W, target_lanes=512):
    # Smallest R dividing H with R*W a multiple of 128 and >= target_lanes lanes.
    for r in range(1, H):
        if H % r == 0 and (r * W) % 128 == 0 and r * W >= target_lanes:
            return r
    return H


def _make_bn_relu_conv1x1_stats_kernel(R, W):
    RW = R * W

    def kernel(x_ref, s1_ref, b1_ref, w1t_ref, cb1_ref,
               h_ref, htop_ref, hbot_ref, hsum_ref, hsq_ref):
        # x_ref: (1, Cin, RW) f32   w1t_ref: (C1, Cin) bf16   h_ref: (1, C1, RW) bf16
        x = x_ref[0]
        y = jnp.maximum(x * s1_ref[...] + b1_ref[...], 0.0)           # BN1 (folded) + ReLU, f32
        h = jnp.dot(w1t_ref[...], y.astype(jnp.bfloat16),
                    preferred_element_type=jnp.float32) + cb1_ref[...]
        # BN2 statistics accumulated in f32 BEFORE the bf16 downcast of h.
        hsum_ref[0, 0] = jnp.sum(h, axis=-1, keepdims=True)           # (C1, 1)
        hsq_ref[0, 0] = jnp.sum(h * h, axis=-1, keepdims=True)        # (C1, 1)
        hb = h.astype(jnp.bfloat16)
        h_ref[0] = hb
        htop_ref[0, 0] = hb[:, :W]          # first row of this block (dy=+1 halo for block r-1)
        hbot_ref[0, 0] = hb[:, RW - W:]     # last  row of this block (dy=-1 halo for block r+1)

    return kernel


def _make_bn_relu_conv3x3_concat_kernel(R, W, Cin):
    RW = R * W
    taps = [(dy, dx) for dy in (-1, 0, 1) for dx in (-1, 0, 1)]

    def kernel(x_ref, h_ref, hup_ref, hdn_ref, s2_ref, b2_ref, w2_ref, cb2_ref,
               o_ref, hpad_ref):
        # x_ref: (1, Cin, RW) f32       h_ref: (1, C1, RW) bf16
        # hup/hdn: (1, 1, C1, W) bf16   w2_ref: (9, G, C1) bf16
        # o_ref: (1, Cin+G, RW) f32     hpad_ref: VMEM (C1, (R+4)*W) bf16
        r = pl.program_id(1)
        nrb = pl.num_programs(1)
        s2 = s2_ref[...]
        b2 = b2_ref[...]

        body = jnp.maximum(h_ref[0].astype(jnp.float32) * s2 + b2, 0.0)   # BN2 + ReLU, f32
        C1 = body.shape[0]
        G = w2_ref.shape[1]
        hpad_ref[:, pl.ds(2 * W, RW)] = body.astype(jnp.bfloat16)

        # Halo rows; zeroed at the image top/bottom (= zero padding of the 3x3 conv).
        up_valid = (r > 0).astype(jnp.float32)
        dn_valid = (r < nrb - 1).astype(jnp.float32)
        up = jnp.maximum(hup_ref[0, 0].astype(jnp.float32) * s2 + b2, 0.0) * up_valid
        dn = jnp.maximum(hdn_ref[0, 0].astype(jnp.float32) * s2 + b2, 0.0) * dn_valid
        hpad_ref[:, pl.ds(W, W)] = up.astype(jnp.bfloat16)
        hpad_ref[:, pl.ds((R + 2) * W, W)] = dn.astype(jnp.bfloat16)

        # Column predicates: only the 6 dx != 0 taps need them; no dy masks (halo).
        col = jax.lax.broadcasted_iota(jnp.int32, (C1, RW), 1) % W
        not_left = col != 0
        not_right = col != (W - 1)

        # 9 per-tap MXU matmuls (K = C1) accumulated in f32 -- no im2col scratch.
        acc = jnp.zeros((G, RW), jnp.float32)
        for k, (dy, dx) in enumerate(taps):
            tap = hpad_ref[:, pl.ds((dy + 2) * W + dx, RW)]               # (C1, RW) bf16
            if dx == -1:
                tap = jnp.where(not_left, tap, jnp.zeros_like(tap))
            elif dx == 1:
                tap = jnp.where(not_right, tap, jnp.zeros_like(tap))
            acc = acc + jnp.dot(w2_ref[k], tap, preferred_element_type=jnp.float32)
        conv2 = acc + cb2_ref[...]

        # Fused channel concat as two slice stores (no concatenated temporary).
        # (Cin not a multiple of 8 -> Mosaic relayouts the sublane offset; still correct.)
        o_ref[0, :Cin, :] = x_ref[0]
        o_ref[0, Cin:, :] = conv2

    return kernel


def dense_layer_forward(x_nchw, params, eps=1e-5, row_block=None):
    x_nchw = x_nchw.astype(jnp.float32)
    N, Cin, H, W = x_nchw.shape
    HW = H * W

    R = _pick_row_block(H, W) if row_block is None else int(row_block)
    assert H % R == 0 and ((R * W) % 128 == 0 or R == H), (R, H, W)
    RB = H // R
    RW = R * W

    x = x_nchw.reshape(N, Cin, HW)           # free reshape: channels on sublanes, H*W on lanes

    w1 = params["conv1_w"]                    # (Cin, C1)
    w2 = params["conv2_w"]                    # (3, 3, C1, G)  HWIO
    C1 = w1.shape[1]
    G = w2.shape[-1]

    # BN1 training-mode batch statistics folded into per-channel scale/bias (tiny glue).
    # TODO(synk): in a stacked DenseNet, take these from the previous layer's kernel-emitted
    #             channel sums (like hsum/hsq below) instead of an extra XLA pass over x.
    m1 = jnp.mean(x, axis=(0, 2))
    v1 = jnp.var(x, axis=(0, 2))
    s1 = params["bn1_gamma"] / jnp.sqrt(v1 + eps)
    b1 = params["bn1_beta"] - m1 * s1

    k1_blocks = [((1, Cin, RW), jnp.float32), ((Cin, 1), jnp.float32), ((Cin, 1), jnp.float32),
                 ((C1, Cin), jnp.bfloat16), ((C1, 1), jnp.float32),
                 ((1, C1, RW), jnp.bfloat16), ((1, 1, C1, W), jnp.bfloat16),
                 ((1, 1, C1, W), jnp.bfloat16), ((1, 1, C1, 1), jnp.float32),
                 ((1, 1, C1, 1), jnp.float32)]
    vmem1 = _vmem_limit([_nbytes(s, d) for s, d in k1_blocks])

    h, htop, hbot, hsum, hsq = pl.pallas_call(
        _make_bn_relu_conv1x1_stats_kernel(R, W),
        out_shape=(
            jax.ShapeDtypeStruct((N, C1, HW), jnp.bfloat16),
            jax.ShapeDtypeStruct((N, RB, C1, W), jnp.bfloat16),
            jax.ShapeDtypeStruct((N, RB, C1, W), jnp.bfloat16),
            jax.ShapeDtypeStruct((N, RB, C1, 1), jnp.float32),
            jax.ShapeDtypeStruct((N, RB, C1, 1), jnp.float32),
        ),
        grid_spec=pltpu.PrefetchScalarGridSpec(
            num_scalar_prefetch=0,
            grid=(N, RB),
            in_specs=[
                pl.BlockSpec((1, Cin, RW), lambda n, r: (n, 0, r)),
                pl.BlockSpec((Cin, 1), lambda n, r: (0, 0)),
                pl.BlockSpec((Cin, 1), lambda n, r: (0, 0)),
                pl.BlockSpec((C1, Cin), lambda n, r: (0, 0)),
                pl.BlockSpec((C1, 1), lambda n, r: (0, 0)),
            ],
            out_specs=(
                pl.BlockSpec((1, C1, RW), lambda n, r: (n, 0, r)),
                pl.BlockSpec((1, 1, C1, W), lambda n, r: (n, r, 0, 0)),
                pl.BlockSpec((1, 1, C1, W), lambda n, r: (n, r, 0, 0)),
                pl.BlockSpec((1, 1, C1, 1), lambda n, r: (n, r, 0, 0)),
                pl.BlockSpec((1, 1, C1, 1), lambda n, r: (n, r, 0, 0)),
            ),
        ),
        compiler_params=pltpu.CompilerParams(
            dimension_semantics=("parallel", "parallel"),
            vmem_limit_bytes=vmem1),
    )(x, s1.reshape(Cin, 1), b1.reshape(Cin, 1),
      w1.T.astype(jnp.bfloat16), params["conv1_b"].reshape(C1, 1))

    # BN2 batch stats from kernel-1 f32 partial sums (no extra HBM pass over h).
    cnt = jnp.float32(N * HW)
    sum2 = jnp.sum(hsum, axis=(0, 1))[:, 0]
    sumsq2 = jnp.sum(hsq, axis=(0, 1))[:, 0]
    m2 = sum2 / cnt
    v2 = jnp.maximum(sumsq2 / cnt - m2 * m2, 0.0)      # biased var = PyTorch training BN
    s2 = params["bn2_gamma"] / jnp.sqrt(v2 + eps)
    b2 = params["bn2_beta"] - m2 * s2

    # (9, G, C1), tap order k = (dy+1)*3 + (dx+1).
    w2taps = jnp.transpose(w2, (0, 1, 3, 2)).reshape(9, G, C1).astype(jnp.bfloat16)

    k2_blocks = [((1, Cin, RW), jnp.float32), ((1, C1, RW), jnp.bfloat16),
                 ((1, 1, C1, W), jnp.bfloat16), ((1, 1, C1, W), jnp.bfloat16),
                 ((C1, 1), jnp.float32), ((C1, 1), jnp.float32),
                 ((9, G, C1), jnp.bfloat16), ((G, 1), jnp.float32),
                 ((1, Cin + G, RW), jnp.float32)]
    vmem2 = _vmem_limit([_nbytes(s, d) for s, d in k2_blocks],
                        scratch_bytes=_nbytes((C1, (R + 4) * W), jnp.bfloat16))

    out = pl.pallas_call(
        _make_bn_relu_conv3x3_concat_kernel(R, W, Cin),
        out_shape=jax.ShapeDtypeStruct((N, Cin + G, HW), jnp.float32),
        grid_spec=pltpu.PrefetchScalarGridSpec(
            num_scalar_prefetch=0,
            grid=(N, RB),
            in_specs=[
                pl.BlockSpec((1, Cin, RW), lambda n, r: (n, 0, r)),
                pl.BlockSpec((1, C1, RW), lambda n, r: (n, 0, r)),
                # last row of the previous row block (dy=-1 halo), clamped at the top edge
                pl.BlockSpec((1, 1, C1, W), lambda n, r: (n, jnp.maximum(r - 1, 0), 0, 0)),
                # first row of the next row block (dy=+1 halo), clamped at the bottom edge
                pl.BlockSpec((1, 1, C1, W), lambda n, r: (n, jnp.minimum(r + 1, RB - 1), 0, 0)),
                pl.BlockSpec((C1, 1), lambda n, r: (0, 0)),
                pl.BlockSpec((C1, 1), lambda n, r: (0, 0)),
                pl.BlockSpec((9, G, C1), lambda n, r: (0, 0, 0)),
                pl.BlockSpec((G, 1), lambda n, r: (0, 0)),
            ],
            out_specs=pl.BlockSpec((1, Cin + G, RW), lambda n, r: (n, 0, r)),
            scratch_shapes=[pltpu.VMEM((C1, (R + 4) * W), jnp.bfloat16)],
        ),
        compiler_params=pltpu.CompilerParams(
            dimension_semantics=("parallel", "parallel"),
            vmem_limit_bytes=vmem2),
    )(x, h, hbot, htop, s2.reshape(C1, 1), b2.reshape(C1, 1),
      w2taps, params["conv2_b"].reshape(G, 1))

    return out.reshape(N, Cin + G, H, W)


def ref_forward(x_nchw, params, eps=1e-5):
    """Pure-JAX f32 NCHW reference mirroring the PyTorch forward (training-mode BN)."""
    x = x_nchw.astype(jnp.float32)

    def bn(z, gamma, beta):
        m = jnp.mean(z, axis=(0, 2, 3), keepdims=True)
        v = jnp.var(z, axis=(0, 2, 3), keepdims=True)
        return (z - m) / jnp.sqrt(v + eps) * gamma.reshape(1, -1, 1, 1) + beta.reshape(1, -1, 1, 1)

    y1 = jax.nn.relu(bn(x, params["bn1_gamma"], params["bn1_beta"]))
    w1_oihw = params["conv1_w"].T[:, :, None, None]
    c1 = jax.lax.conv_general_dilated(y1, w1_oihw, (1, 1), "VALID",
                                      dimension_numbers=("NCHW", "OIHW", "NCHW"))
    c1 = c1 + params["conv1_b"].reshape(1, -1, 1, 1)
    y2 = jax.nn.relu(bn(c1, params["bn2_gamma"], params["bn2_beta"]))
    w2_oihw = jnp.transpose(params["conv2_w"], (3, 2, 0, 1))
    c2 = jax.lax.conv_general_dilated(y2, w2_oihw, (1, 1), ((1, 1), (1, 1)),
                                      dimension_numbers=("NCHW", "OIHW", "NCHW"))
    c2 = c2 + params["conv2_b"].reshape(1, -1, 1, 1)
    return jnp.concatenate([x, c2], axis=1)


if __name__ == "__main__":
    key = jax.random.PRNGKey(0)
    N, Cin, H, W = 2, 4, 16, 16
    growth = 4
    C1 = 4 * growth

    kx, k0, k1, k2, k3, k4, k5, k6, k7 = jax.random.split(key, 9)
    params = {
        "bn1_gamma": jax.random.uniform(k0, (Cin,), jnp.float32, 0.5, 1.5),
        "bn1_beta":  jax.random.normal(k1, (Cin,), jnp.float32) * 0.1,
        "bn2_gamma": jax.random.uniform(k2, (C1,), jnp.float32, 0.5, 1.5),
        "bn2_beta":  jax.random.normal(k3, (C1,), jnp.float32) * 0.1,
        "conv1_w":   jax.random.normal(k4, (Cin, C1), jnp.float32) * 0.2,            # (Cin, 4g)
        "conv1_b":   jax.random.normal(k5, (C1,), jnp.float32) * 0.1,
        "conv2_w":   jax.random.normal(k6, (3, 3, C1, growth), jnp.float32) * 0.1,   # HWIO
        "conv2_b":   jax.random.normal(k7, (growth,), jnp.float32) * 0.1,
    }
    x = jax.random.normal(kx, (N, Cin, H, W), jnp.float32)

    ref = jax.block_until_ready(ref_forward(x, params))

    # row_block=8 -> two 128-lane row blocks per image: exercises the halo path.
    fwd_tiled = jax.jit(lambda a, p: dense_layer_forward(a, p, row_block=8))
    out = jax.block_until_ready(fwd_tiled(x, params))
    assert out.shape == (N, Cin + growth, H, W), out.shape
    # Passthrough channels are copied bit-exactly.
    assert jnp.allclose(out[:, :Cin], ref[:, :Cin], atol=1e-5, rtol=1e-5)
    # Conv path uses bf16 MXU operands and a bf16 h round trip -> bf16-level tolerance.
    err = jnp.abs(out[:, Cin:] - ref[:, Cin:])
    assert float(jnp.max(err)) < 1e-1 and float(jnp.mean(err)) < 2e-2, (
        float(jnp.max(err)), float(jnp.mean(err)))

    # Whole-image (single row block) path.
    out2 = jax.block_until_ready(jax.jit(dense_layer_forward)(x, params))
    err2 = jnp.abs(out2[:, Cin:] - ref[:, Cin:])
    assert float(jnp.max(err2)) < 1e-1 and float(jnp.mean(err2)) < 2e-2, (
        float(jnp.max(err2)), float(jnp.mean(err2)))

    print("KERNEL_OK")
</pallas_src>

<mosaic_0001>
module attributes {stable_mosaic.version = 11 : i64} {
  func.func @kernel(%arg0: i32, %arg1: i32, %arg2: memref<1x4x128xf32, #tpu.memory_space<vmem>>, %arg3: memref<4x1xf32, #tpu.memory_space<vmem>>, %arg4: memref<4x1xf32, #tpu.memory_space<vmem>>, %arg5: memref<16x4xbf16, #tpu.memory_space<vmem>>, %arg6: memref<16x1xf32, #tpu.memory_space<vmem>>, %arg7: memref<1x16x128xbf16, #tpu.memory_space<vmem>>, %arg8: memref<1x1x16x16xbf16, #tpu.memory_space<vmem>>, %arg9: memref<1x1x16x16xbf16, #tpu.memory_space<vmem>>, %arg10: memref<1x1x16x1xf32, #tpu.memory_space<vmem>>, %arg11: memref<1x1x16x1xf32, #tpu.memory_space<vmem>>) attributes {dimension_semantics = [#tpu.dimension_semantics<parallel>, #tpu.dimension_semantics<parallel>], iteration_bounds = array<i64: 2, 2>, scalar_prefetch = 0 : i64, scratch_operands = 0 : i64, tpu.core_type = #tpu.core_type<tc>, window_params = [{transform_indices = @transform_0, window_bounds = array<i64: 1, 4, 128>}, {pipeline_mode = #tpu.pipeline_mode<synchronous>, transform_indices = @transform_1, window_bounds = array<i64: 4, 1>}, {pipeline_mode = #tpu.pipeline_mode<synchronous>, transform_indices = @transform_2, window_bounds = array<i64: 4, 1>}, {pipeline_mode = #tpu.pipeline_mode<synchronous>, transform_indices = @transform_3, window_bounds = array<i64: 16, 4>}, {pipeline_mode = #tpu.pipeline_mode<synchronous>, transform_indices = @transform_4, window_bounds = array<i64: 16, 1>}, {transform_indices = @transform_5, window_bounds = array<i64: 1, 16, 128>}, {transform_indices = @transform_6, window_bounds = array<i64: 1, 1, 16, 16>}, {transform_indices = @transform_7, window_bounds = array<i64: 1, 1, 16, 16>}, {transform_indices = @transform_8, window_bounds = array<i64: 1, 1, 16, 1>}, {transform_indices = @transform_9, window_bounds = array<i64: 1, 1, 16, 1>}]} {
    %c0 = arith.constant 0 : index
    %c0_0 = arith.constant 0 : index
    %c0_1 = arith.constant 0 : index
    %0 = vector.load %arg2[%c0, %c0_0, %c0_1] : memref<1x4x128xf32, #tpu.memory_space<vmem>>, vector<1x4x128xf32>
    %1 = vector.shape_cast %0 : vector<1x4x128xf32> to vector<4x128xf32>
    %c0_2 = arith.constant 0 : index
    %c0_3 = arith.constant 0 : index
    %2 = vector.load %arg3[%c0_2, %c0_3] : memref<4x1xf32, #tpu.memory_space<vmem>>, vector<4x1xf32>
    %3 = vector.broadcast %2 : vector<4x1xf32> to vector<4x128xf32>
    %4 = arith.mulf %1, %3 : vector<4x128xf32>
    %c0_4 = arith.constant 0 : index
    %c0_5 = arith.constant 0 : index
    %5 = vector.load %arg4[%c0_4, %c0_5] : memref<4x1xf32, #tpu.memory_space<vmem>>, vector<4x1xf32>
    %6 = vector.broadcast %5 : vector<4x1xf32> to vector<4x128xf32>
    %7 = arith.addf %4, %6 : vector<4x128xf32>
    %cst = arith.constant 0.000000e+00 : f32
    %8 = vector.broadcast %cst : f32 to vector<4x128xf32>
    %9 = arith.maximumf %7, %8 : vector<4x128xf32>
    %c0_6 = arith.constant 0 : index
    %c0_7 = arith.constant 0 : index
    %10 = vector.load %arg5[%c0_6, %c0_7] : memref<16x4xbf16, #tpu.memory_space<vmem>>, vector<16x4xbf16>
    %11 = arith.truncf %9 : vector<4x128xf32> to vector<4x128xbf16>
    %cst_8 = arith.constant dense<0.000000e+00> : vector<16x128xf32>
    %12 = tpu.matmul %10, %11, %cst_8 {dimension_numbers = #tpu.dot_dimension_numbers<[1], [0], [0], [1], [0, 0, 1, 1], [], []>} : vector<16x4xbf16>, vector<4x128xbf16>, vector<16x128xf32> -> vector<16x128xf32>
    %c0_9 = arith.constant 0 : index
    %c0_10 = arith.constant 0 : index
    %13 = vector.load %arg6[%c0_9, %c0_10] : memref<16x1xf32, #tpu.memory_space<vmem>>, vector<16x1xf32>
    %14 = vector.broadcast %13 : vector<16x1xf32> to vector<16x128xf32>
    %15 = arith.addf %12, %14 : vector<16x128xf32>
    %cst_11 = arith.constant dense<0.000000e+00> : vector<16xf32>
    %16 = vector.multi_reduction <add>, %15, %cst_11 [1] : vector<16x128xf32> to vector<16xf32>
    %17 = vector.shape_cast %16 : vector<16xf32> to vector<16x1xf32>
    %c0_12 = arith.constant 0 : index
    %c0_13 = arith.constant 0 : index
    %c0_14 = arith.constant 0 : index
    %c0_15 = arith.constant 0 : index
    %18 = vector.load %arg10[%c0_12, %c0_13, %c0_14, %c0_15] : memref<1x1x16x1xf32, #tpu.memory_space<vmem>>, vector<1x1x16x1xf32>
    %19 = vector.shape_cast %18 : vector<1x1x16x1xf32> to vector<16x1xf32>
    %20 = vector.shape_cast %17 : vector<16x1xf32> to vector<1x1x16x1xf32>
    tpu.vector_store %arg10[%c0_12, %c0_13, %c0_14, %c0_15], %20 {strides = array<i32>} : memref<1x1x16x1xf32, #tpu.memory_space<vmem>>, vector<1x1x16x1xf32>,
    %21 = arith.mulf %15, %15 : vector<16x128xf32>
    %cst_16 = arith.constant dense<0.000000e+00> : vector<16xf32>
    %22 = vector.multi_reduction <add>, %21, %cst_16 [1] : vector<16x128xf32> to vector<16xf32>
    %23 = vector.shape_cast %22 : vector<16xf32> to vector<16x1xf32>
    %c0_17 = arith.constant 0 : index
    %c0_18 = arith.constant 0 : index
    %c0_19 = arith.constant 0 : index
    %c0_20 = arith.constant 0 : index
    %24 = vector.load %arg11[%c0_17, %c0_18, %c0_19, %c0_20] : memref<1x1x16x1xf32, #tpu.memory_space<vmem>>, vector<1x1x16x1xf32>
    %25 = vector.shape_cast %24 : vector<1x1x16x1xf32> to vector<16x1xf32>
    %26 = vector.shape_cast %23 : vector<16x1xf32> to vector<1x1x16x1xf32>
    tpu.vector_store %arg11[%c0_17, %c0_18, %c0_19, %c0_20], %26 {strides = array<i32>} : memref<1x1x16x1xf32, #tpu.memory_space<vmem>>, vector<1x1x16x1xf32>,
    %27 = arith.truncf %15 : vector<16x128xf32> to vector<16x128xbf16>
    %c0_21 = arith.constant 0 : index
    %c0_22 = arith.constant 0 : index
    %c0_23 = arith.constant 0 : index
    %28 = vector.load %arg7[%c0_21, %c0_22, %c0_23] : memref<1x16x128xbf16, #tpu.memory_space<vmem>>, vector<1x16x128xbf16>
    %29 = vector.shape_cast %28 : vector<1x16x128xbf16> to vector<16x128xbf16>
    %30 = vector.shape_cast %27 : vector<16x128xbf16> to vector<1x16x128xbf16>
    tpu.vector_store %arg7[%c0_21, %c0_22, %c0_23], %30 {strides = array<i32>} : memref<1x16x128xbf16, #tpu.memory_space<vmem>>, vector<1x16x128xbf16>,
    %31 = vector.extract_strided_slice %27 {offsets = [0, 0], sizes = [16, 16], strides = [1, 1]} : vector<16x128xbf16> to vector<16x16xbf16>
    %c0_24 = arith.constant 0 : index
    %c0_25 = arith.constant 0 : index
    %c0_26 = arith.constant 0 : index
    %c0_27 = arith.constant 0 : index
    %32 = vector.load %arg8[%c0_24, %c0_25, %c0_26, %c0_27] : memref<1x1x16x16xbf16, #tpu.memory_space<vmem>>, vector<1x1x16x16xbf16>
    %33 = vector.shape_cast %32 : vector<1x1x16x16xbf16> to vector<16x16xbf16>
    %34 = vector.shape_cast %31 : vector<16x16xbf16> to vector<1x1x16x16xbf16>
    tpu.vector_store %arg8[%c0_24, %c0_25, %c0_26, %c0_27], %34 {strides = array<i32>} : memref<1x1x16x16xbf16, #tpu.memory_space<vmem>>, vector<1x1x16x16xbf16>,
    %35 = vector.extract_strided_slice %27 {offsets = [0, 112], sizes = [16, 16], strides = [1, 1]} : vector<16x128xbf16> to vector<16x16xbf16>
    %c0_28 = arith.constant 0 : index
    %c0_29 = arith.constant 0 : index
    %c0_30 = arith.constant 0 : index
    %c0_31 = arith.constant 0 : index
    %36 = vector.load %arg9[%c0_28, %c0_29, %c0_30, %c0_31] : memref<1x1x16x16xbf16, #tpu.memory_space<vmem>>, vector<1x1x16x16xbf16>
    %37 = vector.shape_cast %36 : vector<1x1x16x16xbf16> to vector<16x16xbf16>
    %38 = vector.shape_cast %35 : vector<16x16xbf16> to vector<1x1x16x16xbf16>
    tpu.vector_store %arg9[%c0_28, %c0_29, %c0_30, %c0_31], %38 {strides = array<i32>} : memref<1x1x16x16xbf16, #tpu.memory_space<vmem>>, vector<1x1x16x16xbf16>,
    return
  }
  func.func @transform_0(%arg0: i32, %arg1: i32) -> (i32, i32, i32) {
    %c0_i32 = arith.constant 0 : i32
    %c0_i32_0 = arith.constant 0 : i32
    return %arg0, %c0_i32, %arg1 : i32, i32, i32
  }
  func.func @transform_1(%arg0: i32, %arg1: i32) -> (i32, i32) {
    %c0_i32 = arith.constant 0 : i32
    %c0_i32_0 = arith.constant 0 : i32
    %c0_i32_1 = arith.constant 0 : i32
    return %c0_i32, %c0_i32_0 : i32, i32
  }
  func.func @transform_2(%arg0: i32, %arg1: i32) -> (i32, i32) {
    %c0_i32 = arith.constant 0 : i32
    %c0_i32_0 = arith.constant 0 : i32
    %c0_i32_1 = arith.constant 0 : i32
    return %c0_i32, %c0_i32_0 : i32, i32
  }
  func.func @transform_3(%arg0: i32, %arg1: i32) -> (i32, i32) {
    %c0_i32 = arith.constant 0 : i32
    %c0_i32_0 = arith.constant 0 : i32
    %c0_i32_1 = arith.constant 0 : i32
    return %c0_i32, %c0_i32_0 : i32, i32
  }
  func.func @transform_4(%arg0: i32, %arg1: i32) -> (i32, i32) {
    %c0_i32 = arith.constant 0 : i32
    %c0_i32_0 = arith.constant 0 : i32
    %c0_i32_1 = arith.constant 0 : i32
    return %c0_i32, %c0_i32_0 : i32, i32
  }
  func.func @transform_5(%arg0: i32, %arg1: i32) -> (i32, i32, i32) {
    %c0_i32 = arith.constant 0 : i32
    %c0_i32_0 = arith.constant 0 : i32
    return %arg0, %c0_i32, %arg1 : i32, i32, i32
  }
  func.func @transform_6(%arg0: i32, %arg1: i32) -> (i32, i32, i32, i32) {
    %c0_i32 = arith.constant 0 : i32
    %c0_i32_0 = arith.constant 0 : i32
    %c0_i32_1 = arith.constant 0 : i32
    return %arg0, %arg1, %c0_i32, %c0_i32_0 : i32, i32, i32, i32
  }
  func.func @transform_7(%arg0: i32, %arg1: i32) -> (i32, i32, i32, i32) {
    %c0_i32 = arith.constant 0 : i32
    %c0_i32_0 = arith.constant 0 : i32
    %c0_i32_1 = arith.constant 0 : i32
    return %arg0, %arg1, %c0_i32, %c0_i32_0 : i32, i32, i32, i32
  }
  func.func @transform_8(%arg0: i32, %arg1: i32) -> (i32, i32, i32, i32) {
    %c0_i32 = arith.constant 0 : i32
    %c0_i32_0 = arith.constant 0 : i32
    %c0_i32_1 = arith.constant 0 : i32
    return %arg0, %arg1, %c0_i32, %c0_i32_0 : i32, i32, i32, i32
  }
  func.func @transform_9(%arg0: i32, %arg1: i32) -> (i32, i32, i32, i32) {
    %c0_i32 = arith.constant 0 : i32
    %c0_i32_0 = arith.constant 0 : i32
    %c0_i32_1 = arith.constant 0 : i32
    return %arg0, %arg1, %c0_i32, %c0_i32_0 : i32, i32, i32, i32
  }
}

module attributes {stable_mosaic.version = 11 : i64} {
  func.func @kernel(%arg0: i32, %arg1: i32, %arg2: memref<1x4x128xf32, #tpu.memory_space<vmem>>, %arg3: memref<1x16x128xbf16, #tpu.memory_space<vmem>>, %arg4: memref<1x1x16x16xbf16, #tpu.memory_space<vmem>>, %arg5: memref<1x1x16x16xbf16, #tpu.memory_space<vmem>>, %arg6: memref<16x1xf32, #tpu.memory_space<vmem>>, %arg7: memref<16x1xf32, #tpu.memory_space<vmem>>, %arg8: memref<9x4x16xbf16, #tpu.memory_space<vmem>>, %arg9: memref<4x1xf32, #tpu.memory_space<vmem>>, %arg10: memref<1x8x128xf32, #tpu.memory_space<vmem>>, %arg11: memref<16x192xbf16, #tpu.memory_space<vmem>>) attributes {dimension_semantics = [#tpu.dimension_semantics<parallel>, #tpu.dimension_semantics<parallel>], iteration_bounds = array<i64: 2, 2>, scalar_prefetch = 0 : i64, scratch_operands = 1 : i64, tpu.core_type = #tpu.core_type<tc>, window_params = [{transform_indices = @transform_0, window_bounds = array<i64: 1, 4, 128>}, {transform_indices = @transform_1, window_bounds = array<i64: 1, 16, 128>}, {transform_indices = @transform_2, window_bounds = array<i64: 1, 1, 16, 16>}, {transform_indices = @transform_3, window_bounds = array<i64: 1, 1, 16, 16>}, {pipeline_mode = #tpu.pipeline_mode<synchronous>, transform_indices = @transform_4, window_bounds = array<i64: 16, 1>}, {pipeline_mode = #tpu.pipeline_mode<synchronous>, transform_indices = @transform_5, window_bounds = array<i64: 16, 1>}, {pipeline_mode = #tpu.pipeline_mode<synchronous>, transform_indices = @transform_6, window_bounds = array<i64: 9, 4, 16>}, {pipeline_mode = #tpu.pipeline_mode<synchronous>, transform_indices = @transform_7, window_bounds = array<i64: 4, 1>}, {transform_indices = @transform_8, window_bounds = array<i64: 1, 8, 128>}]} {
    %c0 = arith.constant 0 : index
    %c0_0 = arith.constant 0 : index
    %0 = vector.load %arg6[%c0, %c0_0] : memref<16x1xf32, #tpu.memory_space<vmem>>, vector<16x1xf32>
    %c0_1 = arith.constant 0 : index
    %c0_2 = arith.constant 0 : index
    %1 = vector.load %arg7[%c0_1, %c0_2] : memref<16x1xf32, #tpu.memory_space<vmem>>, vector<16x1xf32>
    %c0_3 = arith.constant 0 : index
    %c0_4 = arith.constant 0 : index
    %c0_5 = arith.constant 0 : index
    %2 = vector.load %arg3[%c0_3, %c0_4, %c0_5] : memref<1x16x128xbf16, #tpu.memory_space<vmem>>, vector<1x16x128xbf16>
    %3 = vector.shape_cast %2 : vector<1x16x128xbf16> to vector<16x128xbf16>
    %4 = arith.extf %3 : vector<16x128xbf16> to vector<16x128xf32>
    %5 = vector.broadcast %0 : vector<16x1xf32> to vector<16x128xf32>
    %6 = arith.mulf %4, %5 : vector<16x128xf32>
    %7 = vector.broadcast %1 : vector<16x1xf32> to vector<16x128xf32>
    %8 = arith.addf %6, %7 : vector<16x128xf32>
    %cst = arith.constant 0.000000e+00 : f32
    %9 = vector.broadcast %cst : f32 to vector<16x128xf32>
    %10 = arith.maximumf %8, %9 : vector<16x128xf32>
    %11 = arith.truncf %10 : vector<16x128xf32> to vector<16x128xbf16>
    %c0_6 = arith.constant 0 : index
    %c32 = arith.constant 32 : index
    %12 = vector.load %arg11[%c0_6, %c32] : memref<16x192xbf16, #tpu.memory_space<vmem>>, vector<16x128xbf16>
    tpu.vector_store %arg11[%c0_6, %c32], %11 {strides = array<i32>} : memref<16x192xbf16, #tpu.memory_space<vmem>>, vector<16x128xbf16>,
    %c0_i32 = arith.constant 0 : i32
    %13 = arith.cmpi sgt, %arg1, %c0_i32 : i32
    %14 = arith.extui %13 : i1 to i32
    %15 = arith.sitofp %14 : i32 to f32
    %c1_i32 = arith.constant 1 : i32
    %16 = arith.cmpi slt, %arg1, %c1_i32 : i32
    %17 = arith.extui %16 : i1 to i32
    %18 = arith.sitofp %17 : i32 to f32
    %c0_7 = arith.constant 0 : index
    %c0_8 = arith.constant 0 : index
    %c0_9 = arith.constant 0 : index
    %c0_10 = arith.constant 0 : index
    %19 = vector.load %arg4[%c0_7, %c0_8, %c0_9, %c0_10] : memref<1x1x16x16xbf16, #tpu.memory_space<vmem>>, vector<1x1x16x16xbf16>
    %20 = vector.shape_cast %19 : vector<1x1x16x16xbf16> to vector<16x16xbf16>
    %21 = arith.extf %20 : vector<16x16xbf16> to vector<16x16xf32>
    %22 = vector.broadcast %0 : vector<16x1xf32> to vector<16x16xf32>
    %23 = arith.mulf %21, %22 : vector<16x16xf32>
    %24 = vector.broadcast %1 : vector<16x1xf32> to vector<16x16xf32>
    %25 = arith.addf %23, %24 : vector<16x16xf32>
    %cst_11 = arith.constant 0.000000e+00 : f32
    %26 = vector.broadcast %cst_11 : f32 to vector<16x16xf32>
    %27 = arith.maximumf %25, %26 : vector<16x16xf32>
    %28 = vector.broadcast %15 : f32 to vector<16x16xf32>
    %29 = arith.mulf %27, %28 : vector<16x16xf32>
    %c0_12 = arith.constant 0 : index
    %c0_13 = arith.constant 0 : index
    %c0_14 = arith.constant 0 : index
    %c0_15 = arith.constant 0 : index
    %30 = vector.load %arg5[%c0_12, %c0_13, %c0_14, %c0_15] : memref<1x1x16x16xbf16, #tpu.memory_space<vmem>>, vector<1x1x16x16xbf16>
    %31 = vector.shape_cast %30 : vector<1x1x16x16xbf16> to vector<16x16xbf16>
    %32 = arith.extf %31 : vector<16x16xbf16> to vector<16x16xf32>
    %33 = vector.broadcast %0 : vector<16x1xf32> to vector<16x16xf32>
    %34 = arith.mulf %32, %33 : vector<16x16xf32>
    %35 = vector.broadcast %1 : vector<16x1xf32> to vector<16x16xf32>
    %36 = arith.addf %34, %35 : vector<16x16xf32>
    %cst_16 = arith.constant 0.000000e+00 : f32
    %37 = vector.broadcast %cst_16 : f32 to vector<16x16xf32>
    %38 = arith.maximumf %36, %37 : vector<16x16xf32>
    %39 = vector.broadcast %18 : f32 to vector<16x16xf32>
    %40 = arith.mulf %38, %39 : vector<16x16xf32>
    %41 = arith.truncf %29 : vector<16x16xf32> to vector<16x16xbf16>
    %c0_17 = arith.constant 0 : index
    %c16 = arith.constant 16 : index
    %42 = vector.load %arg11[%c0_17, %c16] : memref<16x192xbf16, #tpu.memory_space<vmem>>, vector<16x16xbf16>
    tpu.vector_store %arg11[%c0_17, %c16], %41 {strides = array<i32>} : memref<16x192xbf16, #tpu.memory_space<vmem>>, vector<16x16xbf16>,
    %43 = arith.truncf %40 : vector<16x16xf32> to vector<16x16xbf16>
    %c0_18 = arith.constant 0 : index
    %c160 = arith.constant 160 : index
    %44 = vector.load %arg11[%c0_18, %c160] : memref<16x192xbf16, #tpu.memory_space<vmem>>, vector<16x16xbf16>
    tpu.vector_store %arg11[%c0_18, %c160], %43 {strides = array<i32>} : memref<16x192xbf16, #tpu.memory_space<vmem>>, vector<16x16xbf16>,
    %45 = tpu.iota {dimensions = array<i32: 1>} : vector<16x128xi32>
    %c16_i32 = arith.constant 16 : i32
    %c0_i32_19 = arith.constant 0 : i32
    %46 = arith.cmpi eq, %c16_i32, %c0_i32_19 : i32
    %c1_i32_20 = arith.constant 1 : i32
    %47 = arith.select %46, %c1_i32_20, %c16_i32 : i32
    %48 = vector.broadcast %47 : i32 to vector<16x128xi32>
    %49 = arith.remsi %45, %48 : vector<16x128xi32>
    %c0_i32_21 = arith.constant 0 : i32
    %50 = vector.broadcast %c0_i32_21 : i32 to vector<16x128xi32>
    %51 = arith.cmpi ne, %49, %50 : vector<16x128xi32>
    %c0_i32_22 = arith.constant 0 : i32
    %52 = vector.broadcast %c0_i32_22 : i32 to vector<16x128xi32>
    %53 = arith.cmpi slt, %49, %52 : vector<16x128xi32>
    %c0_i32_23 = arith.constant 0 : i32
    %54 = arith.cmpi slt, %47, %c0_i32_23 : i32
    %55 = vector.broadcast %54 : i1 to vector<16x128xi1>
    %56 = vector.broadcast %55 : vector<16x128xi1> to vector<16x128xi1>
    %57 = arith.xori %53, %56 : vector<16x128xi1>
    %58 = arith.andi %57, %51 : vector<16x128xi1>
    %59 = vector.broadcast %47 : i32 to vector<16x128xi32>
    %60 = arith.addi %49, %59 : vector<16x128xi32>
    %61 = arith.select %58, %60, %49 : vector<16x128xi1>, vector<16x128xi32>
    %c0_i32_24 = arith.constant 0 : i32
    %62 = vector.broadcast %c0_i32_24 : i32 to vector<16x128xi32>
    %63 = arith.cmpi ne, %61, %62 : vector<16x128xi32>
    %c15_i32 = arith.constant 15 : i32
    %64 = vector.broadcast %c15_i32 : i32 to vector<16x128xi32>
    %65 = arith.cmpi ne, %61, %64 : vector<16x128xi32>
    %cst_25 = arith.constant 0.000000e+00 : f32
    %66 = vector.broadcast %cst_25 : f32 to vector<4x128xf32>
    %c0_26 = arith.constant 0 : index
    %c15 = arith.constant 15 : index
    %67 = vector.load %arg11[%c0_26, %c15] : memref<16x192xbf16, #tpu.memory_space<vmem>>, vector<16x128xbf16>
    %cst_27 = arith.constant 0.000000e+00 : bf16
    %68 = vector.broadcast %cst_27 : bf16 to vector<16x128xbf16>
    %69 = arith.select %63, %67, %68 : vector<16x128xi1>, vector<16x128xbf16>
    %c0_28 = arith.constant 0 : index
    %c0_29 = arith.constant 0 : index
    %c0_30 = arith.constant 0 : index
    %70 = vector.load %arg8[%c0_28, %c0_29, %c0_30] : memref<9x4x16xbf16, #tpu.memory_space<vmem>>, vector<1x4x16xbf16>
    %71 = vector.shape_cast %70 : vector<1x4x16xbf16> to vector<4x16xbf16>
    %cst_31 = arith.constant dense<0.000000e+00> : vector<4x128xf32>
    %72 = tpu.matmul %71, %69, %cst_31 {dimension_numbers = #tpu.dot_dimension_numbers<[1], [0], [0], [1], [0, 0, 1, 1], [], []>} : vector<4x16xbf16>, vector<16x128xbf16>, vector<4x128xf32> -> vector<4x128xf32>
    %73 = arith.addf %66, %72 : vector<4x128xf32>
    %c0_32 = arith.constant 0 : index
    %c16_33 = arith.constant 16 : index
    %74 = vector.load %arg11[%c0_32, %c16_33] : memref<16x192xbf16, #tpu.memory_space<vmem>>, vector<16x128xbf16>
    %c1 = arith.constant 1 : index
    %c0_34 = arith.constant 0 : index
    %c0_35 = arith.constant 0 : index
    %75 = vector.load %arg8[%c1, %c0_34, %c0_35] : memref<9x4x16xbf16, #tpu.memory_space<vmem>>, vector<1x4x16xbf16>
    %76 = vector.shape_cast %75 : vector<1x4x16xbf16> to vector<4x16xbf16>
    %cst_36 = arith.constant dense<0.000000e+00> : vector<4x128xf32>
    %77 = tpu.matmul %76, %74, %cst_36 {dimension_numbers = #tpu.dot_dimension_numbers<[1], [0], [0], [1], [0, 0, 1, 1], [], []>} : vector<4x16xbf16>, vector<16x128xbf16>, vector<4x128xf32> -> vector<4x128xf32>
    %78 = arith.addf %73, %77 : vector<4x128xf32>
    %c0_37 = arith.constant 0 : index
    %c17 = arith.constant 17 : index
    %79 = vector.load %arg11[%c0_37, %c17] : memref<16x192xbf16, #tpu.memory_space<vmem>>, vector<16x128xbf16>
    %cst_38 = arith.constant 0.000000e+00 : bf16
    %80 = vector.broadcast %cst_38 : bf16 to vector<16x128xbf16>
    %81 = arith.select %65, %79, %80 : vector<16x128xi1>, vector<16x128xbf16>
    %c2 = arith.constant 2 : index
    %c0_39 = arith.constant 0 : index
    %c0_40 = arith.constant 0 : index
    %82 = vector.load %arg8[%c2, %c0_39, %c0_40] : memref<9x4x16xbf16, #tpu.memory_space<vmem>>, vector<1x4x16xbf16>
    %83 = vector.shape_cast %82 : vector<1x4x16xbf16> to vector<4x16xbf16>
    %cst_41 = arith.constant dense<0.000000e+00> : vector<4x128xf32>
    %84 = tpu.matmul %83, %81, %cst_41 {dimension_numbers = #tpu.dot_dimension_numbers<[1], [0], [0], [1], [0, 0, 1, 1], [], []>} : vector<4x16xbf16>, vector<16x128xbf16>, vector<4x128xf32> -> vector<4x128xf32>
    %85 = arith.addf %78, %84 : vector<4x128xf32>
    %c0_42 = arith.constant 0 : index
    %c31 = arith.constant 31 : index
    %86 = vector.load %arg11[%c0_42, %c31] : memref<16x192xbf16, #tpu.memory_space<vmem>>, vector<16x128xbf16>
    %cst_43 = arith.constant 0.000000e+00 : bf16
    %87 = vector.broadcast %cst_43 : bf16 to vector<16x128xbf16>
    %88 = arith.select %63, %86, %87 : vector<16x128xi1>, vector<16x128xbf16>
    %c3 = arith.constant 3 : index
    %c0_44 = arith.constant 0 : index
    %c0_45 = arith.constant 0 : index
    %89 = vector.load %arg8[%c3, %c0_44, %c0_45] : memref<9x4x16xbf16, #tpu.memory_space<vmem>>, vector<1x4x16xbf16>
    %90 = vector.shape_cast %89 : vector<1x4x16xbf16> to vector<4x16xbf16>
    %cst_46 = arith.constant dense<0.000000e+00> : vector<4x128xf32>
    %91 = tpu.matmul %90, %88, %cst_46 {dimension_numbers = #tpu.dot_dimension_numbers<[1], [0], [0], [1], [0, 0, 1, 1], [], []>} : vector<4x16xbf16>, vector<16x128xbf16>, vector<4x128xf32> -> vector<4x128xf32>
    %92 = arith.addf %85, %91 : vector<4x128xf32>
    %c0_47 = arith.constant 0 : index
    %c32_48 = arith.constant 32 : index
    %93 = vector.load %arg11[%c0_47, %c32_48] : memref<16x192xbf16, #tpu.memory_space<vmem>>, vector<16x128xbf16>
    %c4 = arith.constant 4 : index
    %c0_49 = arith.constant 0 : index
    %c0_50 = arith.constant 0 : index
    %94 = vector.load %arg8[%c4, %c0_49, %c0_50] : memref<9x4x16xbf16, #tpu.memory_space<vmem>>, vector<1x4x16xbf16>
    %95 = vector.shape_cast %94 : vector<1x4x16xbf16> to vector<4x16xbf16>
    %cst_51 = arith.constant dense<0.000000e+00> : vector<4x128xf32>
    %96 = tpu.matmul %95, %93, %cst_51 {dimension_numbers = #tpu.dot_dimension_numbers<[1], [0], [0], [1], [0, 0, 1, 1], [], []>} : vector<4x16xbf16>, vector<16x128xbf16>, vector<4x128xf32> -> vector<4x128xf32>
    %97 = arith.addf %92, %96 : vector<4x128xf32>
    %c0_52 = arith.constant 0 : index
    %c33 = arith.constant 33 : index
    %98 = vector.load %arg11[%c0_52, %c33] : memref<16x192xbf16, #tpu.memory_space<vmem>>, vector<16x128xbf16>
    %cst_53 = arith.constant 0.000000e+00 : bf16
    %99 = vector.broadcast %cst_53 : bf16 to vector<16x128xbf16>
    %100 = arith.select %65, %98, %99 : vector<16x128xi1>, vector<16x128xbf16>
    %c5 = arith.constant 5 : index
    %c0_54 = arith.constant 0 : index
    %c0_55 = arith.constant 0 : index
    %101 = vector.load %arg8[%c5, %c0_54, %c0_55] : memref<9x4x16xbf16, #tpu.memory_space<vmem>>, vector<1x4x16xbf16>
    %102 = vector.shape_cast %101 : vector<1x4x16xbf16> to vector<4x16xbf16>
    %cst_56 = arith.constant dense<0.000000e+00> : vector<4x128xf32>
    %103 = tpu.matmul %102, %100, %cst_56 {dimension_numbers = #tpu.dot_dimension_numbers<[1], [0], [0], [1], [0, 0, 1, 1], [], []>} : vector<4x16xbf16>, vector<16x128xbf16>, vector<4x128xf32> -> vector<4x128xf32>
    %104 = arith.addf %97, %103 : vector<4x128xf32>
    %c0_57 = arith.constant 0 : index
    %c47 = arith.constant 47 : index
    %105 = vector.load %arg11[%c0_57, %c47] : memref<16x192xbf16, #tpu.memory_space<vmem>>, vector<16x128xbf16>
    %cst_58 = arith.constant 0.000000e+00 : bf16
    %106 = vector.broadcast %cst_58 : bf16 to vector<16x128xbf16>
    %107 = arith.select %63, %105, %106 : vector<16x128xi1>, vector<16x128xbf16>
    %c6 = arith.constant 6 : index
    %c0_59 = arith.constant 0 : index
    %c0_60 = arith.constant 0 : index
    %108 = vector.load %arg8[%c6, %c0_59, %c0_60] : memref<9x4x16xbf16, #tpu.memory_space<vmem>>, vector<1x4x16xbf16>
    %109 = vector.shape_cast %108 : vector<1x4x16xbf16> to vector<4x16xbf16>
    %cst_61 = arith.constant dense<0.000000e+00> : vector<4x128xf32>
    %110 = tpu.matmul %109, %107, %cst_61 {dimension_numbers = #tpu.dot_dimension_numbers<[1], [0], [0], [1], [0, 0, 1, 1], [], []>} : vector<4x16xbf16>, vector<16x128xbf16>, vector<4x128xf32> -> vector<4x128xf32>
    %111 = arith.addf %104, %110 : vector<4x128xf32>
    %c0_62 = arith.constant 0 : index
    %c48 = arith.constant 48 : index
    %112 = vector.load %arg11[%c0_62, %c48] : memref<16x192xbf16, #tpu.memory_space<vmem>>, vector<16x128xbf16>
    %c7 = arith.constant 7 : index
    %c0_63 = arith.constant 0 : index
    %c0_64 = arith.constant 0 : index
    %113 = vector.load %arg8[%c7, %c0_63, %c0_64] : memref<9x4x16xbf16, #tpu.memory_space<vmem>>, vector<1x4x16xbf16>
    %114 = vector.shape_cast %113 : vector<1x4x16xbf16> to vector<4x16xbf16>
    %cst_65 = arith.constant dense<0.000000e+00> : vector<4x128xf32>
    %115 = tpu.matmul %114, %112, %cst_65 {dimension_numbers = #tpu.dot_dimension_numbers<[1], [0], [0], [1], [0, 0, 1, 1], [], []>} : vector<4x16xbf16>, vector<16x128xbf16>, vector<4x128xf32> -> vector<4x128xf32>
    %116 = arith.addf %111, %115 : vector<4x128xf32>
    %c0_66 = arith.constant 0 : index
    %c49 = arith.constant 49 : index
    %117 = vector.load %arg11[%c0_66, %c49] : memref<16x192xbf16, #tpu.memory_space<vmem>>, vector<16x128xbf16>
    %cst_67 = arith.constant 0.000000e+00 : bf16
    %118 = vector.broadcast %cst_67 : bf16 to vector<16x128xbf16>
    %119 = arith.select %65, %117, %118 : vector<16x128xi1>, vector<16x128xbf16>
    %c8 = arith.constant 8 : index
    %c0_68 = arith.constant 0 : index
    %c0_69 = arith.constant 0 : index
    %120 = vector.load %arg8[%c8, %c0_68, %c0_69] : memref<9x4x16xbf16, #tpu.memory_space<vmem>>, vector<1x4x16xbf16>
    %121 = vector.shape_cast %120 : vector<1x4x16xbf16> to vector<4x16xbf16>
    %cst_70 = arith.constant dense<0.000000e+00> : vector<4x128xf32>
    %122 = tpu.matmul %121, %119, %cst_70 {dimension_numbers = #tpu.dot_dimension_numbers<[1], [0], [0], [1], [0, 0, 1, 1], [], []>} : vector<4x16xbf16>, vector<16x128xbf16>, vector<4x128xf32> -> vector<4x128xf32>
    %123 = arith.addf %116, %122 : vector<4x128xf32>
    %c0_71 = arith.constant 0 : index
    %c0_72 = arith.constant 0 : index
    %124 = vector.load %arg9[%c0_71, %c0_72] : memref<4x1xf32, #tpu.memory_space<vmem>>, vector<4x1xf32>
    %125 = vector.broadcast %124 : vector<4x1xf32> to vector<4x128xf32>
    %126 = arith.addf %123, %125 : vector<4x128xf32>
    %c0_73 = arith.constant 0 : index
    %c0_74 = arith.constant 0 : index
    %c0_75 = arith.constant 0 : index
    %127 = vector.load %arg2[%c0_73, %c0_74, %c0_75] : memref<1x4x128xf32, #tpu.memory_space<vmem>>, vector<1x4x128xf32>
    %128 = vector.shape_cast %127 : vector<1x4x128xf32> to vector<4x128xf32>
    %c0_76 = arith.constant 0 : index
    %c0_77 = arith.constant 0 : index
    %c0_78 = arith.constant 0 : index
    %129 = vector.load %arg10[%c0_76, %c0_77, %c0_78] : memref<1x8x128xf32, #tpu.memory_space<vmem>>, vector<1x4x128xf32>
    %130 = vector.shape_cast %129 : vector<1x4x128xf32> to vector<4x128xf32>
    %131 = vector.shape_cast %128 : vector<4x128xf32> to vector<1x4x128xf32>
    tpu.vector_store %arg10[%c0_76, %c0_77, %c0_78], %131 {strides = array<i32>} : memref<1x8x128xf32, #tpu.memory_space<vmem>>, vector<1x4x128xf32>,
    %c0_79 = arith.constant 0 : index
    %c4_80 = arith.constant 4 : index
    %c0_81 = arith.constant 0 : index
    %132 = vector.load %arg10[%c0_79, %c4_80, %c0_81] : memref<1x8x128xf32, #tpu.memory_space<vmem>>, vector<1x4x128xf32>
    %133 = vector.shape_cast %132 : vector<1x4x128xf32> to vector<4x128xf32>
    %134 = vector.shape_cast %126 : vector<4x128xf32> to vector<1x4x128xf32>
    tpu.vector_store %arg10[%c0_79, %c4_80, %c0_81], %134 {strides = array<i32>} : memref<1x8x128xf32, #tpu.memory_space<vmem>>, vector<1x4x128xf32>,
    return
  }
  func.func @transform_0(%arg0: i32, %arg1: i32) -> (i32, i32, i32) {
    %c0_i32 = arith.constant 0 : i32
    %c0_i32_0 = arith.constant 0 : i32
    return %arg0, %c0_i32, %arg1 : i32, i32, i32
  }
  func.func @transform_1(%arg0: i32, %arg1: i32) -> (i32, i32, i32) {
    %c0_i32 = arith.constant 0 : i32
    %c0_i32_0 = arith.constant 0 : i32
    return %arg0, %c0_i32, %arg1 : i32, i32, i32
  }
  func.func @transform_2(%arg0: i32, %arg1: i32) -> (i32, i32, i32, i32) {
    %c1_i32 = arith.constant 1 : i32
    %0 = arith.subi %arg1, %c1_i32 : i32
    %c0_i32 = arith.constant 0 : i32
    %1 = arith.maxsi %0, %c0_i32 : i32
    %c0_i32_0 = arith.constant 0 : i32
    %c0_i32_1 = arith.constant 0 : i32
    %c0_i32_2 = arith.constant 0 : i32
    return %arg0, %1, %c0_i32_0, %c0_i32_1 : i32, i32, i32, i32
  }
  func.func @transform_3(%arg0: i32, %arg1: i32) -> (i32, i32, i32, i32) {
    %c1_i32 = arith.constant 1 : i32
    %0 = arith.addi %arg1, %c1_i32 : i32
    %c1_i32_0 = arith.constant 1 : i32
    %1 = arith.minsi %0, %c1_i32_0 : i32
    %c0_i32 = arith.constant 0 : i32
    %c0_i32_1 = arith.constant 0 : i32
    %c0_i32_2 = arith.constant 0 : i32
    return %arg0, %1, %c0_i32, %c0_i32_1 : i32, i32, i32, i32
  }
  func.func @transform_4(%arg0: i32, %arg1: i32) -> (i32, i32) {
    %c0_i32 = arith.constant 0 : i32
    %c0_i32_0 = arith.constant 0 : i32
    %c0_i32_1 = arith.constant 0 : i32
    return %c0_i32, %c0_i32_0 : i32, i32
  }
  func.func @transform_5(%arg0: i32, %arg1: i32) -> (i32, i32) {
    %c0_i32 = arith.constant 0 : i32
    %c0_i32_0 = arith.constant 0 : i32
    %c0_i32_1 = arith.constant 0 : i32
    return %c0_i32, %c0_i32_0 : i32, i32
  }
  func.func @transform_6(%arg0: i32, %arg1: i32) -> (i32, i32, i32) {
    %c0_i32 = arith.constant 0 : i32
    %c0_i32_0 = arith.constant 0 : i32
    %c0_i32_1 = arith.constant 0 : i32
    %c0_i32_2 = arith.constant 0 : i32
    return %c0_i32, %c0_i32_0, %c0_i32_1 : i32, i32, i32
  }
  func.func @transform_7(%arg0: i32, %arg1: i32) -> (i32, i32) {
    %c0_i32 = arith.constant 0 : i32
    %c0_i32_0 = arith.constant 0 : i32
    %c0_i32_1 = arith.constant 0 : i32
    return %c0_i32, %c0_i32_0 : i32, i32
  }
  func.func @transform_8(%arg0: i32, %arg1: i32) -> (i32, i32, i32) {
    %c0_i32 = arith.constant 0 : i32
    %c0_i32_0 = arith.constant 0 : i32
    return %arg0, %c0_i32, %arg1 : i32, i32, i32
  }
}

</mosaic_0001>

<llo_original>
// kernel: _lambda_.2
$region0: #{_lambda_.2}
  #allocation0 [shape = 'u32[]', space=smem, size = 0x4, offset = 0x4, fixed_abs, tag = 'smem constant byte address 0x4 - core index']
  #allocation1 [shape = 'u32[144,128]{1,0:T(1,128)}', space=vmem, size = 0x12000, scoped, tag = 'internal scratch']
  %s0 = inlined_call_operand.vmem [shape: f32[2,4,256], index: 0, kind: input, shape index: {}]
  %s1 = inlined_call_operand.vmem [shape: f32[4,1], index: 1, kind: input, shape index: {}]
  %s2 = inlined_call_operand.vmem [shape: f32[4,1], index: 2, kind: input, shape index: {}]
  %s3 = inlined_call_operand.vmem [shape: bf16[16,4], index: 3, kind: input, shape index: {}]
  %s4 = inlined_call_operand.vmem [shape: f32[16,1], index: 4, kind: input, shape index: {}]
  %s5 = inlined_call_operand.vmem [shape: bf16[2,16,256], index: 5, kind: output, shape index: {0}]
  %s6 = inlined_call_operand.vmem [shape: bf16[2,2,16,16], index: 6, kind: output, shape index: {1}]
  %s7 = inlined_call_operand.vmem [shape: bf16[2,2,16,16], index: 7, kind: output, shape index: {2}]
  %s8 = inlined_call_operand.vmem [shape: f32[2,2,16,1], index: 8, kind: output, shape index: {3}]
  %s9 = inlined_call_operand.vmem [shape: f32[2,2,16,1], index: 9, kind: output, shape index: {4}]
  %10 = xla_tuple %s5, %s6, %s7, %s8, %s9
  %s11 = sld [smem:[#allocation0]]
  $region122: #{_lambda_.2} parent=0
    _
  %s13 = ssub.s32 1, %s11
  %s14 = scalar_select 0, %s13, %s11
  $region1: #{_lambda_.2} parent=0
    #allocation2 [shape = 'u8[8192]{0}', space=vmem, size = 0x2000, scoped, tag = 'output window, operand 0']
    loop: start=0, step=1, limit=6
    $region2: #{_lambda_.2} parent=1 // loop_pre_header
      _
    $region3: #{_lambda_.2} parent=1 // loop_header
      %s16 = sphi 0, %s20
      %p17 = scmp.ge.s32.totalorder %s16, 6
      %s23 = sphi 0, %s35
      %s24 = sphi 0, %s31
      %s25 = sphi 0, %s23
      %s26 = sphi 0, %s24
      %s27 = sphi 0, %s25
      %s28 = sphi 0, %s26
      %s40 = sphi 0, %s42
      %s43 = sphi 0, %s40
      %s44 = sphi 0, %s43
      %s60 = sphi 0, %s44
      %s64 = sphi 0, %s64
      %s66 = sphi 0, %s64
      %s67 = sphi 0, %s66
      %s81 = sphi 0, %s67
      %s85 = sphi 0, %s85
      %s87 = sphi 0, %s85
      %s88 = sphi 0, %s87
      %s102 = sphi 0, %s88
      %s106 = sphi 0, %s106
      %s108 = sphi 0, %s106
      %s109 = sphi 0, %s108
      %s123 = sphi 0, %s109
      %s127 = sphi 0, %s127
      %s129 = sphi 0, %s127
      %s130 = sphi 0, %s129
      %s144 = sphi 0, %s130
      %s152 = sphi 0, %s154
      %s155 = sphi 0, %s152
      %s156 = sphi 0, %s155
      %s172 = sphi 0, %s156
      %s180 = sphi 0, %s182
      %s183 = sphi 0, %s180
      %s184 = sphi 0, %s183
      %s200 = sphi 0, %s184
      %s208 = sphi 0, %s210
      %s211 = sphi 0, %s208
      %s212 = sphi 0, %s211
      %s228 = sphi 0, %s212
      %s236 = sphi 0, %s238
      %s239 = sphi 0, %s236
      %s240 = sphi 0, %s239
      %s256 = sphi 0, %s240
      %s264 = sphi 0, %s266
      %s267 = sphi 0, %s264
      %s268 = sphi 0, %s267
      %s284 = sphi 0, %s268
    $region4: #{_lambda_.2} parent=1 // loop_header_branch
      %19 = sbr.rel (%p17) target = $region8
    $region5: #{_lambda_.2} parent=1 // loop_body
      %s21 = ssub.s32 %s16, 1
      %s22 = ssub.s32 %s16, 2
      %s29 = sadd.s32 1, %s24
      %p30 = scmp.ge.s32.totalorder %s29, 2
      %s31 = scalar_select %p30, 0, %s29
      %s32 = sadd.s32 1, %s23
      %s33 = scalar_select %p30, %s32, %s23
      %p34 = scmp.ge.s32.totalorder %s33, 2
      %s35 = scalar_select %p34, 0, %s33
      %s36 = ssub.s32 %s23, %s35
      %s37 = ssub.s32 %s24, %s31
      %s38 = sor.u32 %s36, %s37
      %p39 = scmp.eq.s32.totalorder %s38, 0
      %s41 = sadd.s32 %s40, 1
      %s42 = scalar_select %p39, %s40, %s41
      %p45 = pneg %p39
      %p46 = scmp.eq.s32.totalorder %s16, 3
      %p47 = por %p45, %p46
      %p48 = scmp.ne.s32.totalorder %s40, %s43
      %p49 = scmp.eq.s32.totalorder %s16, 0
      %p50 = por %p48, %p49
      %p51 = scmp.ne.s32.totalorder %s40, %s43
      %p52 = scmp.eq.s32.totalorder %s21, 3
      %p53 = por %p51, %p52
      %p54 = scmp.ne.s32.totalorder %s43, %s44
      %p55 = scmp.eq.s32.totalorder %s21, 0
      %p56 = por %p54, %p55
      %p57 = scmp.ne.s32.totalorder %s43, %s44
      %p58 = scmp.eq.s32.totalorder %s22, 3
      %p59 = por %p57, %p58
      %p61 = scmp.ne.s32.totalorder %s44, %s60
      %p62 = scmp.eq.s32.totalorder %s22, 0
      %p63 = por %p61, %p62
      %s65 = sadd.s32 %s64, 1
      %p68 = scmp.eq.s32.totalorder %s16, 3
      %p69 = scmp.ne.s32.totalorder %s64, %s66
      %p70 = scmp.eq.s32.totalorder %s16, 0
      %p71 = por %p69, %p70
      %p72 = scmp.ne.s32.totalorder %s64, %s66
      %p73 = scmp.eq.s32.totalorder %s21, 3
      %p74 = por %p72, %p73
      %p75 = scmp.ne.s32.totalorder %s66, %s67
      %p76 = scmp.eq.s32.totalorder %s21, 0
      %p77 = por %p75, %p76
      %p78 = scmp.ne.s32.totalorder %s66, %s67
      %p79 = scmp.eq.s32.totalorder %s22, 3
      %p80 = por %p78, %p79
      %p82 = scmp.ne.s32.totalorder %s67, %s81
      %p83 = scmp.eq.s32.totalorder %s22, 0
      %p84 = por %p82, %p83
      %s86 = sadd.s32 %s85, 1
      %p89 = scmp.eq.s32.totalorder %s16, 3
      %p90 = scmp.ne.s32.totalorder %s85, %s87
      %p91 = scmp.eq.s32.totalorder %s16, 0
      %p92 = por %p90, %p91
      %p93 = scmp.ne.s32.totalorder %s85, %s87
      %p94 = scmp.eq.s32.totalorder %s21, 3
      %p95 = por %p93, %p94
      %p96 = scmp.ne.s32.totalorder %s87, %s88
      %p97 = scmp.eq.s32.totalorder %s21, 0
      %p98 = por %p96, %p97
      %p99 = scmp.ne.s32.totalorder %s87, %s88
      %p100 = scmp.eq.s32.totalorder %s22, 3
      %p101 = por %p99, %p100
      %p103 = scmp.ne.s32.totalorder %s88, %s102
      %p104 = scmp.eq.s32.totalorder %s22, 0
      %p105 = por %p103, %p104
      %s107 = sadd.s32 %s106, 1
      %p110 = scmp.eq.s32.totalorder %s16, 3
      %p111 = scmp.ne.s32.totalorder %s106, %s108
      %p112 = scmp.eq.s32.totalorder %s16, 0
      %p113 = por %p111, %p112
      %p114 = scmp.ne.s32.totalorder %s106, %s108
      %p115 = scmp.eq.s32.totalorder %s21, 3
      %p116 = por %p114, %p115
      %p117 = scmp.ne.s32.totalorder %s108, %s109
      %p118 = scmp.eq.s32.totalorder %s21, 0
      %p119 = por %p117, %p118
      %p120 = scmp.ne.s32.totalorder %s108, %s109
      %p121 = scmp.eq.s32.totalorder %s22, 3
      %p122 = por %p120, %p121
      %p124 = scmp.ne.s32.totalorder %s109, %s123
      %p125 = scmp.eq.s32.totalorder %s22, 0
      %p126 = por %p124, %p125
      %s128 = sadd.s32 %s127, 1
      %p131 = scmp.eq.s32.totalorder %s16, 3
      %p132 = scmp.ne.s32.totalorder %s127, %s129
      %p133 = scmp.eq.s32.totalorder %s16, 0
      %p134 = por %p132, %p133
      %p135 = scmp.ne.s32.totalorder %s127, %s129
      %p136 = scmp.eq.s32.totalorder %s21, 3
      %p137 = por %p135, %p136
      %p138 = scmp.ne.s32.totalorder %s129, %s130
      %p139 = scmp.eq.s32.totalorder %s21, 0
      %p140 = por %p138, %p139
      %p141 = scmp.ne.s32.totalorder %s129, %s130
      %p142 = scmp.eq.s32.totalorder %s22, 3
      %p143 = por %p141, %p142
      %p145 = scmp.ne.s32.totalorder %s130, %s144
      %p146 = scmp.eq.s32.totalorder %s22, 0
      %p147 = por %p145, %p146
      %s148 = ssub.s32 %s23, %s35
      %s149 = ssub.s32 %s24, %s31
      %s150 = sor.u32 %s148, %s149
      %p151 = scmp.eq.s32.totalorder %s150, 0
      %s153 = sadd.s32 %s152, 1
      %s154 = scalar_select %p151, %s152, %s153
      %p157 = pneg %p151
      %p158 = scmp.eq.s32.totalorder %s16, 3
      %p159 = por %p157, %p158
      %p160 = scmp.ne.s32.totalorder %s152, %s155
      %p161 = scmp.eq.s32.totalorder %s16, 0
      %p162 = por %p160, %p161
      %p163 = scmp.ne.s32.totalorder %s152, %s155
      %p164 = scmp.eq.s32.totalorder %s21, 3
      %p165 = por %p163, %p164
      %p166 = scmp.ne.s32.totalorder %s155, %s156
      %p167 = scmp.eq.s32.totalorder %s21, 0
      %p168 = por %p166, %p167
      %p169 = scmp.ne.s32.totalorder %s155, %s156
      %p170 = scmp.eq.s32.totalorder %s22, 3
      %p171 = por %p169, %p170
      %p173 = scmp.ne.s32.totalorder %s156, %s172
      %p174 = scmp.eq.s32.totalorder %s22, 0
      %p175 = por %p173, %p174
      %s176 = ssub.s32 %s23, %s35
      %s177 = ssub.s32 %s24, %s31
      %s178 = sor.u32 %s176, %s177
      %p179 = scmp.eq.s32.totalorder %s178, 0
      %s181 = sadd.s32 %s180, 1
      %s182 = scalar_select %p179, %s180, %s181
      %p185 = pneg %p179
      %p186 = scmp.eq.s32.totalorder %s16, 3
      %p187 = por %p185, %p186
      %p188 = scmp.ne.s32.totalorder %s180, %s183
      %p189 = scmp.eq.s32.totalorder %s16, 0
      %p190 = por %p188, %p189
      %p191 = scmp.ne.s32.totalorder %s180, %s183
      %p192 = scmp.eq.s32.totalorder %s21, 3
      %p193 = por %p191, %p192
      %p194 = scmp.ne.s32.totalorder %s183, %s184
      %p195 = scmp.eq.s32.totalorder %s21, 0
      %p196 = por %p194, %p195
      %p197 = scmp.ne.s32.totalorder %s183, %s184
      %p198 = scmp.eq.s32.totalorder %s22, 3
      %p199 = por %p197, %p198
      %p201 = scmp.ne.s32.totalorder %s184, %s200
      %p202 = scmp.eq.s32.totalorder %s22, 0
      %p203 = por %p201, %p202
      %s204 = ssub.s32 %s23, %s35
      %s205 = ssub.s32 %s24, %s31
      %s206 = sor.u32 %s204, %s205
      %p207 = scmp.eq.s32.totalorder %s206, 0
      %s209 = sadd.s32 %s208, 1
      %s210 = scalar_select %p207, %s208, %s209
      %p213 = pneg %p207
      %p214 = scmp.eq.s32.totalorder %s16, 3
      %p215 = por %p213, %p214
      %p216 = scmp.ne.s32.totalorder %s208, %s211
      %p217 = scmp.eq.s32.totalorder %s16, 0
      %p218 = por %p216, %p217
      %p219 = scmp.ne.s32.totalorder %s208, %s211
      %p220 = scmp.eq.s32.totalorder %s21, 3
      %p221 = por %p219, %p220
      %p222 = scmp.ne.s32.totalorder %s211, %s212
      %p223 = scmp.eq.s32.totalorder %s21, 0
      %p224 = por %p222, %p223
      %p225 = scmp.ne.s32.totalorder %s211, %s212
      %p226 = scmp.eq.s32.totalorder %s22, 3
      %p227 = por %p225, %p226
      %p229 = scmp.ne.s32.totalorder %s212, %s228
      %p230 = scmp.eq.s32.totalorder %s22, 0
      %p231 = por %p229, %p230
      %s232 = ssub.s32 %s23, %s35
      %s233 = ssub.s32 %s24, %s31
      %s234 = sor.u32 %s232, %s233
      %p235 = scmp.eq.s32.totalorder %s234, 0
      %s237 = sadd.s32 %s236, 1
      %s238 = scalar_select %p235, %s236, %s237
      %p241 = pneg %p235
      %p242 = scmp.eq.s32.totalorder %s16, 3
      %p243 = por %p241, %p242
      %p244 = scmp.ne.s32.totalorder %s236, %s239
      %p245 = scmp.eq.s32.totalorder %s16, 0
      %p246 = por %p244, %p245
      %p247 = scmp.ne.s32.totalorder %s236, %s239
      %p248 = scmp.eq.s32.totalorder %s21, 3
      %p249 = por %p247, %p248
      %p250 = scmp.ne.s32.totalorder %s239, %s240
      %p251 = scmp.eq.s32.totalorder %s21, 0
      %p252 = por %p250, %p251
      %p253 = scmp.ne.s32.totalorder %s239, %s240
      %p254 = scmp.eq.s32.totalorder %s22, 3
      %p255 = por %p253, %p254
      %p257 = scmp.ne.s32.totalorder %s240, %s256
      %p258 = scmp.eq.s32.totalorder %s22, 0
      %p259 = por %p257, %p258
      %s260 = ssub.s32 %s23, %s35
      %s261 = ssub.s32 %s24, %s31
      %s262 = sor.u32 %s260, %s261
      %p263 = scmp.eq.s32.totalorder %s262, 0
      %s265 = sadd.s32 %s264, 1
      %s266 = scalar_select %p263, %s264, %s265
      %p269 = pneg %p263
      %p270 = scmp.eq.s32.totalorder %s16, 3
      %p271 = por %p269, %p270
      %p272 = scmp.ne.s32.totalorder %s264, %s267
      %p273 = scmp.eq.s32.totalorder %s16, 0
      %p274 = por %p272, %p273
      %p275 = scmp.ne.s32.totalorder %s264, %s267
      %p276 = scmp.eq.s32.totalorder %s21, 3
      %p277 = por %p275, %p276
      %p278 = scmp.ne.s32.totalorder %s267, %s268
      %p279 = scmp.eq.s32.totalorder %s21, 0
      %p280 = por %p278, %p279
      %p281 = scmp.ne.s32.totalorder %s267, %s268
      %p282 = scmp.eq.s32.totalorder %s22, 3
      %p283 = por %p281, %p282
      %p285 = scmp.ne.s32.totalorder %s268, %s284
      %p286 = scmp.eq.s32.totalorder %s22, 0
      %p287 = por %p285, %p286
      %p288 = scmp.le.s32.totalorder 1, %s16
      %p289 = scmp.lt.s32.totalorder %s16, 5
      %p290 = pnand %p288, %p289
      %p291 = pneg %p290
      // Predicated region
      $region9: #{_lambda_.2} parent=5 // pred_check
        _
      $region10: #{_lambda_.2} parent=5 // pred_check_branch
        %293 = sbr.rel (%p290) target = $region12
      $region11: #{_lambda_.2} parent=5 // pred_region
        %s294 = ssub.s32 %s16, 1
        // Predicated region
        $region13: #{_lambda_.2} parent=11 // pred_check
          %p295 = pneg %p77
        $region14: #{_lambda_.2} parent=11 // pred_check_branch
          %297 = sbr.rel (%p295) target = $region16
        $region15: #{_lambda_.2} parent=11 // pred_region
          _
        $region16: #{_lambda_.2} parent=11 // pred_fallthru
          _
        // Predicated region
        $region17: #{_lambda_.2} parent=11 // pred_check
          %p298 = pneg %p98
        $region18: #{_lambda_.2} parent=11 // pred_check_branch
          %300 = sbr.rel (%p298) target = $region20
        $region19: #{_lambda_.2} parent=11 // pred_region
          _
        $region20: #{_lambda_.2} parent=11 // pred_fallthru
          _
        // Predicated region
        $region21: #{_lambda_.2} parent=11 // pred_check
          %p301 = pneg %p119
        $region22: #{_lambda_.2} parent=11 // pred_check_branch
          %303 = sbr.rel (%p301) target = $region24
        $region23: #{_lambda_.2} parent=11 // pred_region
          _
        $region24: #{_lambda_.2} parent=11 // pred_fallthru
          _
        // Predicated region
        $region25: #{_lambda_.2} parent=11 // pred_check
          %p304 = pneg %p140
        $region26: #{_lambda_.2} parent=11 // pred_check_branch
          %306 = sbr.rel (%p304) target = $region28
        $region27: #{_lambda_.2} parent=11 // pred_region
          _
        $region28: #{_lambda_.2} parent=11 // pred_fallthru
          _
      $region12: #{_lambda_.2} parent=5 // pred_fallthru
        _
      %p307 = scmp.lt.s32.totalorder %s16, 4
      // Predicated region
      $region29: #{_lambda_.2} parent=5 // pred_check
        %p308 = pneg %p307
      $region30: #{_lambda_.2} parent=5 // pred_check_branch
        %310 = sbr.rel (%p308) target = $region32
      $region31: #{_lambda_.2} parent=5 // pred_region
        // Predicated region
        $region33: #{_lambda_.2} parent=31 // pred_check
          %p311 = pneg %p50
        $region34: #{_lambda_.2} parent=31 // pred_check_branch
          %313 = sbr.rel (%p311) target = $region36
        $region35: #{_lambda_.2} parent=31 // pred_region
          %p314 = scmp.lt.s32.totalorder %s23, 1
          %s315 = scalar_select %p314, %s23, 1
          %p316 = scmp.lt.s32.totalorder %s24, 1
          %s317 = scalar_select %p316, %s24, 1
          %s318 = smul.addr %s315, 2
          %s319 = sadd.s32 %s317, %s318
          %s320 = smul.addr %s319, 4
          %s321 = scalar_lea.vmem %s0, %s320
        $region36: #{_lambda_.2} parent=31 // pred_fallthru
          _
      $region32: #{_lambda_.2} parent=5 // pred_fallthru
        _
      %p322 = scmp.le.s32.totalorder 1, %s16
      %p323 = scmp.lt.s32.totalorder %s16, 5
      %p324 = pnand %p322, %p323
      %p325 = pneg %p324
      // Predicated region
      $region37: #{_lambda_.2} parent=5 // pred_check
        _
      $region38: #{_lambda_.2} parent=5 // pred_check_branch
        %327 = sbr.rel (%p324) target = $region40
      $region39: #{_lambda_.2} parent=5 // pred_region
        %s328 = ssub.s32 %s16, 1
        %p329 = scmp.lt.s32.totalorder %s25, 1
        %s330 = scalar_select %p329, %s25, 1
        %p331 = scmp.lt.s32.totalorder %s26, 1
        %s332 = scalar_select %p331, %s26, 1
        %s333 = smul.addr %s330, 2
        %s334 = sadd.s32 %s332, %s333
        %s335 = smul.addr %s334, 4
        %s336 = scalar_lea.vmem %s0, %s335
        %p337 = pneg %p56
        %p338 = pneg %p53
        %p339 = pneg %p77
        %p340 = pneg %p74
        %p341 = pneg %p98
        %p342 = pneg %p95
        %p343 = pneg %p119
        %p344 = pneg %p116
        %p345 = pneg %p140
        %p346 = pneg %p137
        %p347 = pneg %p168
        %p348 = pneg %p165
        %s349 = sand.u32 %s155, 1
        %s350 = sand.u32 %s155, 1
        %s351 = smul.addr %s350, 8
        %s352 = scalar_lea.vmem [#allocation2], %s351
        %p353 = pneg %p196
        %p354 = pneg %p193
        %p355 = scmp.lt.s32.totalorder %s25, 1
        %s356 = scalar_select %p355, %s25, 1
        %p357 = scmp.lt.s32.totalorder %s26, 1
        %s358 = scalar_select %p357, %s26, 1
        %s359 = smul.addr %s358, 2
        %s360 = smul.addr %s356, 4
        %s361 = sadd.s32 %s359, %s360
        %s362 = smul.addr %s361, 4
        %s363 = scalar_lea.vmem %s6, %s362
        %p364 = pneg %p224
        %p365 = pneg %p221
        %p366 = scmp.lt.s32.totalorder %s25, 1
        %s367 = scalar_select %p366, %s25, 1
        %p368 = scmp.lt.s32.totalorder %s26, 1
        %s369 = scalar_select %p368, %s26, 1
        %s370 = smul.addr %s369, 2
        %s371 = smul.addr %s367, 4
        %s372 = sadd.s32 %s370, %s371
        %s373 = smul.addr %s372, 4
        %s374 = scalar_lea.vmem %s7, %s373
        %p375 = pneg %p252
        %p376 = pneg %p249
        %p377 = scmp.lt.s32.totalorder %s25, 1
        %s378 = scalar_select %p377, %s25, 1
        %p379 = scmp.lt.s32.totalorder %s26, 1
        %s380 = scalar_select %p379, %s26, 1
        %s381 = smul.addr %s380, 2
        %s382 = smul.addr %s378, 4
        %s383 = sadd.s32 %s381, %s382
        %s384 = smul.addr %s383, 8
        %s385 = scalar_lea.vmem %s8, %s384
        %p386 = pneg %p280
        %p387 = pneg %p277
        %p388 = scmp.lt.s32.totalorder %s25, 1
        %s389 = scalar_select %p388, %s25, 1
        %p390 = scmp.lt.s32.totalorder %s26, 1
        %s391 = scalar_select %p390, %s26, 1
        %s392 = smul.addr %s391, 2
        %s393 = smul.addr %s389, 4
        %s394 = sadd.s32 %s392, %s393
        %s395 = smul.addr %s394, 8
        %s396 = scalar_lea.vmem %s9, %s395
        %p397 = scmp.lt.s32.totalorder %s25, 1
        %s398 = scalar_select %p397, %s25, 1
        %p399 = scmp.lt.s32.totalorder %s26, 1
        %s400 = scalar_select %p399, %s26, 1
        %s401 = smul.addr %s398, 2
        %s402 = sadd.s32 %s400, %s401
        %s403 = smul.addr %s402, 4
        %s404 = scalar_lea.vmem %s0, %s403
        %p405 = scmp.lt.s32.totalorder %s25, 1
        %s406 = scalar_select %p405, %s25, 1
        %p407 = scmp.lt.s32.totalorder %s26, 1
        %s408 = scalar_select %p407, %s26, 1
        %s409 = smul.addr %s408, 2
        %s410 = smul.addr %s406, 4
        %s411 = sadd.s32 %s409, %s410
        %s412 = smul.addr %s411, 4
        %s413 = scalar_lea.vmem %s6, %s412
        %p414 = scmp.lt.s32.totalorder %s25, 1
        %s415 = scalar_select %p414, %s25, 1
        %p416 = scmp.lt.s32.totalorder %s26, 1
        %s417 = scalar_select %p416, %s26, 1
        %s418 = smul.addr %s417, 2
        %s419 = smul.addr %s415, 4
        %s420 = sadd.s32 %s418, %s419
        %s421 = smul.addr %s420, 4
        %s422 = scalar_lea.vmem %s7, %s421
        %p423 = scmp.lt.s32.totalorder %s25, 1
        %s424 = scalar_select %p423, %s25, 1
        %p425 = scmp.lt.s32.totalorder %s26, 1
        %s426 = scalar_select %p425, %s26, 1
        %s427 = smul.addr %s426, 2
        %s428 = smul.addr %s424, 4
        %s429 = sadd.s32 %s427, %s428
        %s430 = smul.addr %s429, 8
        %s431 = scalar_lea.vmem %s8, %s430
        %p432 = scmp.lt.s32.totalorder %s25, 1
        %s433 = scalar_select %p432, %s25, 1
        %p434 = scmp.lt.s32.totalorder %s26, 1
        %s435 = scalar_select %p434, %s26, 1
        %s436 = smul.addr %s435, 2
        %s437 = smul.addr %s433, 4
        %s438 = sadd.s32 %s436, %s437
        %s439 = smul.addr %s438, 8
        %s440 = scalar_lea.vmem %s9, %s439
        %v442 = vld [vmem:[%s404] sm:$0xf]
        %v443 = vld [vmem:[%s1] sm:$0xf]
        %445 = vset.pattern.permute.xlu0 0
        %446 = vperm.xlu0 %445, %v443
        %v447 = vpop.permute.xlu0 %446
        %v449 = vmul.f32 %v442, %v447
        %v450 = vld [vmem:[%s2] sm:$0xf]
        %452 = vset.pattern.permute.xlu0 0
        %453 = vperm.xlu0 %452, %v450
        %v454 = vpop.permute.xlu0 %453
        %v456 = vadd.f32 %v449, %v454
        %v457 = vmax.f32 %v456, 0.0
        %v458 = vld [vmem:[%s3] sm:$0xf]
        %v459 = vld [vmem:[%s3 + $0x4] sm:$0xf]
        %v460 = vpack.c.bf16 %v457, %v457
        %v461 = vld [vmem:[%s4] sm:$0xff]
        %v462 = vld [vmem:[%s4 + $0x8] sm:$0xff]
        %464 = vset.pattern.permute.xlu0 0
        %465 = vperm.xlu0 %464, %v461
        %v466 = vpop.permute.xlu0 %465
        %469 = vset.pattern.permute.xlu0 0
        %470 = vperm.xlu0 %469, %v462
        %v471 = vpop.permute.xlu0 %470
        %v475 = vunpack.c.l.b16 %v458
        %v476 = vunpack.c.l.b16 %v459
        %v477 = vpack.c.b16 %v476, %v475
        %vm478 = vcmask 31744
        %v480 = vsel %vm478, %v477, 0
        %vm482 = vcmask 1041408
        %v484 = vsel %vm482, %v460, 0
        %486 = vmatprep.subr.bf16.mxu0 0
        %487 = vmatpush1.bf16.msra.mxu0 0
        %488 = vmatprep.subr.bf16.mxu0 0
        %489 = vmatpush1.bf16.msra.mxu0 0
        %490 = vmatprep.subr.bf16.mxu0 0
        %491 = vmatpush1.bf16.msra.mxu0 0
        %492 = vmatprep.subr.bf16.mxu0 0
        %493 = vmatpush1.bf16.msra.mxu0 0
        %494 = vmatprep.subr.bf16.mxu0 0
        %495 = vmatpush1.bf16.msra.mxu0 0
        %496 = vmatprep.subr.bf16.mxu0 0
        %497 = vmatpush1.bf16.msra.mxu0 0
        %498 = vmatprep.subr.bf16.mxu0 0
        %499 = vmatpush1.bf16.msra.mxu0 0
        %500 = vmatprep.subr.bf16.mxu0 0
        %501 = vmatpush1.bf16.msra.mxu0 %v484
        %502 = vmatprep.subr.bf16.mxu0 0
        %503 = vmatpush2.bf16.msra.mxu0 0
        %504 = vmatprep.subr.bf16.mxu0 0
        %505 = vmatpush2.bf16.msra.mxu0 0
        %506 = vmatprep.subr.bf16.mxu0 0
        %507 = vmatpush2.bf16.msra.mxu0 0
        %508 = vmatprep.subr.bf16.mxu0 0
        %509 = vmatpush2.bf16.msra.mxu0 0
        %510 = vmatprep.subr.bf16.mxu0 0
        %511 = vmatpush2.bf16.msra.mxu0 0
        %512 = vmatprep.subr.bf16.mxu0 0
        %513 = vmatpush2.bf16.msra.mxu0 0
        %514 = vmatprep.subr.bf16.mxu0 0
        %515 = vmatpush2.bf16.msra.mxu0 0
        %516 = vmatprep.subr.bf16.mxu0 0
        %517 = vmatpush2.bf16.msra.mxu0 0
        %518 = vmatprep.mubr.bf16.mxu0 0
        %519 = vmatmul.mubr.bf16.gmra.mxu0 %v480
        %v520 = vpop.f32.mrf.mxu0
        %v521 = vadd.f32 %v466, %v520
        %v522 = vpop.f32.mrf.mxu0
        %v523 = vpop.f32.mrf.mxu0
        %v524 = vadd.f32 %v471, %v523
        %v525 = vpop.f32.mrf.mxu0
        %526 = vdwg.mxu0
        %527 = vadd.xlane.f32.xlu0 %v521
        %v528 = vpop.xlane.xlu0 %527
        %529 = vadd.xlane.f32.xlu0 %v524
        %v530 = vpop.xlane.xlu0 %529
        %vm531 = vcmask 7168
        %532 = vst.msk [vmem:[%s431] sm:$0xff] %vm531, %v528
        %533 = vst.msk [vmem:[%s431 + $0x8] sm:$0xff] %vm531, %v530
        %v534 = vmul.f32 %v521, %v521
        %v535 = vmul.f32 %v524, %v524
        %536 = vadd.xlane.f32.xlu0 %v534
        %v537 = vpop.xlane.xlu0 %536
        %538 = vadd.xlane.f32.xlu0 %v535
        %v539 = vpop.xlane.xlu0 %538
        %540 = vst.msk [vmem:[%s440] sm:$0xff] %vm531, %v537
        %541 = vst.msk [vmem:[%s440 + $0x8] sm:$0xff] %vm531, %v539
        %v542 = vpack.c.bf16 %v524, %v521
        %v544 = vunpack.c.l.b16 %v542
        %v545 = vunpack.c.h.b16 %v542
        %v546 = vpack.c.b16 %v544, %v544
        %v547 = vpack.c.b16 %v545, %v545
        %550 = vst [vmem:[%s352] sm:$0xf] %v546
        %551 = vst [vmem:[%s352 + $0x4] sm:$0xf] %v547
        %vm552 = vcmask 125952
        %553 = vst.msk [vmem:[%s413] sm:$0xf] %vm552, %v546
        %554 = vst.msk [vmem:[%s413 + $0x4] sm:$0xf] %vm552, %v547
        %555 = vrot.lane.b32.xlu0 %v546, 16
        %v556 = vpop.permute.xlu0 %555
        %557 = vrot.lane.b32.xlu0 %v547, 16
        %v558 = vpop.permute.xlu0 %557
        %561 = vst.msk [vmem:[%s422] sm:$0xf] %vm552, %v556
        %562 = vst.msk [vmem:[%s422 + $0x4] sm:$0xf] %vm552, %v558
        %s563 = sand.u32 %s155, 1
        %s564 = sand.u32 %s155, 1
        %s565 = smul.addr %s564, 8
        %s566 = scalar_lea.vmem [#allocation2], %s565
        %p567 = scmp.lt.s32.totalorder %s25, 1
        %s568 = scalar_select %p567, %s25, 1
        %p569 = scmp.lt.s32.totalorder %s26, 1
        %s570 = scalar_select %p569, %s26, 1
        %s571 = smul.addr %s570, 2
        %s572 = smul.addr %s568, 4
        %s573 = sadd.s32 %s571, %s572
        %s574 = smul.addr %s573, 4
        %s575 = scalar_lea.vmem %s6, %s574
        %p576 = scmp.lt.s32.totalorder %s25, 1
        %s577 = scalar_select %p576, %s25, 1
        %p578 = scmp.lt.s32.totalorder %s26, 1
        %s579 = scalar_select %p578, %s26, 1
        %s580 = smul.addr %s579, 2
        %s581 = smul.addr %s577, 4
        %s582 = sadd.s32 %s580, %s581
        %s583 = smul.addr %s582, 4
        %s584 = scalar_lea.vmem %s7, %s583
        %p585 = scmp.lt.s32.totalorder %s25, 1
        %s586 = scalar_select %p585, %s25, 1
        %p587 = scmp.lt.s32.totalorder %s26, 1
        %s588 = scalar_select %p587, %s26, 1
        %s589 = smul.addr %s588, 2
        %s590 = smul.addr %s586, 4
        %s591 = sadd.s32 %s589, %s590
        %s592 = smul.addr %s591, 8
        %s593 = scalar_lea.vmem %s8, %s592
        %p594 = scmp.lt.s32.totalorder %s25, 1
        %s595 = scalar_select %p594, %s25, 1
        %p596 = scmp.lt.s32.totalorder %s26, 1
        %s597 = scalar_select %p596, %s26, 1
        %s598 = smul.addr %s597, 2
        %s599 = smul.addr %s595, 4
        %s600 = sadd.s32 %s598, %s599
        %s601 = smul.addr %s600, 8
        %s602 = scalar_lea.vmem %s9, %s601
        // Predicated region
        $region41: #{_lambda_.2} parent=39 // pred_check
          %p603 = pneg %p165
        $region42: #{_lambda_.2} parent=39 // pred_check_branch
          %605 = sbr.rel (%p603) target = $region44
        $region43: #{_lambda_.2} parent=39 // pred_region
          %s606 = smul.addr %s25, 4
          %s607 = sadd.s32 %s26, %s606
          %s608 = smul.addr %s607, 4
          %s609 = scalar_lea.vmem %s5, %s608
          // Predicated region
          $region45: #{_lambda_.2} parent=43 // pred_check
            _
          $region46: #{_lambda_.2} parent=43 // pred_check_branch
            %611 = sbr.rel (0) target = $region48
          $region47: #{_lambda_.2} parent=43 // pred_region
            // Predicated region
            $region49: #{_lambda_.2} parent=47 // pred_check
              _
            $region50: #{_lambda_.2} parent=47 // pred_check_branch
              %613 = sbr.rel target = $region52
            $region51: #{_lambda_.2} parent=47 // pred_region
              // Predicated region
              $region64: #{_lambda_.2} parent=51 // pred_check
                _
              $region65: #{_lambda_.2} parent=51 // pred_check_branch
                %631 = sbr.rel (0) target = $region67
              $region66: #{_lambda_.2} parent=51 // pred_region
                loop: start=0, step=1, limit=1
                $region68: #{_lambda_.2} parent=66 // loop_pre_header
                  _
                $region69: #{_lambda_.2} parent=66 // loop_header
                  %s633 = sphi 0, %s637
                  %p634 = scmp.ge.s32.totalorder %s633, 1
                  %s638 = sphi %s566, %s566
                  %s639 = sphi %s609, %s609
                $region70: #{_lambda_.2} parent=66 // loop_header_branch
                  %636 = sbr.rel (%p634) target = $region74
                $region71: #{_lambda_.2} parent=66 // loop_body
                  _
                $region72: #{_lambda_.2} parent=66 // loop_footer
                  %s637 = sadd.s32 1, %s633
                $region73: #{_lambda_.2} parent=66 // loop_footer_branch
                  %632 = sbr.rel target = $region69
                $region74: #{_lambda_.2} parent=66 // loop_exit
                  _
                %s641 = ssub.s32 16, 1
                loop: start=0, step=1, limit=1
                $region75: #{_lambda_.2} parent=66 // loop_pre_header
                  _
                $region76: #{_lambda_.2} parent=66 // loop_header
                  %s643 = sphi 0, %s647
                  %p644 = scmp.ge.s32.totalorder %s643, 1
                  %s648 = sphi %s566, %s566
                  %s649 = sphi %s609, %s609
                $region77: #{_lambda_.2} parent=66 // loop_header_branch
                  %646 = sbr.rel (%p644) target = $region81
                $region78: #{_lambda_.2} parent=66 // loop_body
                  %v650 = vld [vmem:[%s648] sm:%s641]
                  %651 = vst [vmem:[%s649] sm:%s641] %v650
                  %v652 = vld [vmem:[%s648 + $0x4] sm:%s641]
                  %653 = vst [vmem:[%s649 + $0x8] sm:%s641] %v652
                $region79: #{_lambda_.2} parent=66 // loop_footer
                  %s647 = sadd.s32 1, %s643
                $region80: #{_lambda_.2} parent=66 // loop_footer_branch
                  %642 = sbr.rel target = $region76
                $region81: #{_lambda_.2} parent=66 // loop_exit
                  _
              $region67: #{_lambda_.2} parent=51 // pred_fallthru
                _
            $region52: #{_lambda_.2} parent=47 // pred_fallthru
              _
            // Predicated region
            $region53: #{_lambda_.2} parent=47 // pred_check
              _
            $region54: #{_lambda_.2} parent=47 // pred_check_branch
              %615 = sbr.rel (0) target = $region56
            $region55: #{_lambda_.2} parent=47 // pred_region
              %s617 = ssub.s32 16, 1
              loop: start=0, step=1, limit=1
              $region57: #{_lambda_.2} parent=55 // loop_pre_header
                _
              $region58: #{_lambda_.2} parent=55 // loop_header
                %s619 = sphi 0, %s623
                %p620 = scmp.ge.s32.totalorder %s619, 1
                %s624 = sphi %s566, %s566
                %s625 = sphi %s609, %s609
              $region59: #{_lambda_.2} parent=55 // loop_header_branch
                %622 = sbr.rel (%p620) target = $region63
              $region60: #{_lambda_.2} parent=55 // loop_body
                %v626 = vld [vmem:[%s624] sm:%s617]
                %627 = vst [vmem:[%s625] sm:%s617] %v626
                %v628 = vld [vmem:[%s624 + $0x4] sm:%s617]
                %629 = vst [vmem:[%s625 + $0x8] sm:%s617] %v628
              $region61: #{_lambda_.2} parent=55 // loop_footer
                %s623 = sadd.s32 1, %s619
              $region62: #{_lambda_.2} parent=55 // loop_footer_branch
                %618 = sbr.rel target = $region58
              $region63: #{_lambda_.2} parent=55 // loop_exit
                _
            $region56: #{_lambda_.2} parent=47 // pred_fallthru
              _
          $region48: #{_lambda_.2} parent=43 // pred_fallthru
            _
          %654 = vnop
        $region44: #{_lambda_.2} parent=39 // pred_fallthru
          _
        // Predicated region
        $region82: #{_lambda_.2} parent=39 // pred_check
          %p655 = pneg %p193
        $region83: #{_lambda_.2} parent=39 // pred_check_branch
          %657 = sbr.rel (%p655) target = $region85
        $region84: #{_lambda_.2} parent=39 // pred_region
          _
        $region85: #{_lambda_.2} parent=39 // pred_fallthru
          _
        // Predicated region
        $region86: #{_lambda_.2} parent=39 // pred_check
          %p658 = pneg %p221
        $region87: #{_lambda_.2} parent=39 // pred_check_branch
          %660 = sbr.rel (%p658) target = $region89
        $region88: #{_lambda_.2} parent=39 // pred_region
          _
        $region89: #{_lambda_.2} parent=39 // pred_fallthru
          _
        // Predicated region
        $region90: #{_lambda_.2} parent=39 // pred_check
          %p661 = pneg %p249
        $region91: #{_lambda_.2} parent=39 // pred_check_branch
          %663 = sbr.rel (%p661) target = $region93
        $region92: #{_lambda_.2} parent=39 // pred_region
          _
        $region93: #{_lambda_.2} parent=39 // pred_fallthru
          _
        // Predicated region
        $region94: #{_lambda_.2} parent=39 // pred_check
          %p664 = pneg %p277
        $region95: #{_lambda_.2} parent=39 // pred_check_branch
          %666 = sbr.rel (%p664) target = $region97
        $region96: #{_lambda_.2} parent=39 // pred_region
          _
        $region97: #{_lambda_.2} parent=39 // pred_fallthru
          _
      $region40: #{_lambda_.2} parent=5 // pred_fallthru
        _
      %p667 = scmp.le.s32.totalorder 2, %s16
      // Predicated region
      $region98: #{_lambda_.2} parent=5 // pred_check
        %p668 = pneg %p667
      $region99: #{_lambda_.2} parent=5 // pred_check_branch
        %670 = sbr.rel (%p668) target = $region101
      $region100: #{_lambda_.2} parent=5 // pred_region
        %s671 = ssub.s32 %s16, 2
        // Predicated region
        $region102: #{_lambda_.2} parent=100 // pred_check
          %p672 = pneg %p171
        $region103: #{_lambda_.2} parent=100 // pred_check_branch
          %674 = sbr.rel (%p672) target = $region105
        $region104: #{_lambda_.2} parent=100 // pred_region
          %s675 = sand.u32 %s156, 1
          %s676 = sand.u32 %s156, 1
          %s677 = smul.addr %s676, 8
          %s678 = scalar_lea.vmem [#allocation2], %s677
        $region105: #{_lambda_.2} parent=100 // pred_fallthru
          _
        // Predicated region
        $region106: #{_lambda_.2} parent=100 // pred_check
          %p679 = pneg %p199
        $region107: #{_lambda_.2} parent=100 // pred_check_branch
          %681 = sbr.rel (%p679) target = $region109
        $region108: #{_lambda_.2} parent=100 // pred_region
          %p682 = scmp.lt.s32.totalorder %s27, 1
          %s683 = scalar_select %p682, %s27, 1
          %p684 = scmp.lt.s32.totalorder %s28, 1
          %s685 = scalar_select %p684, %s28, 1
          %s686 = smul.addr %s685, 2
          %s687 = smul.addr %s683, 4
          %s688 = sadd.s32 %s686, %s687
          %s689 = smul.addr %s688, 4
          %s690 = scalar_lea.vmem %s6, %s689
        $region109: #{_lambda_.2} parent=100 // pred_fallthru
          _
        // Predicated region
        $region110: #{_lambda_.2} parent=100 // pred_check
          %p691 = pneg %p227
        $region111: #{_lambda_.2} parent=100 // pred_check_branch
          %693 = sbr.rel (%p691) target = $region113
        $region112: #{_lambda_.2} parent=100 // pred_region
          %p694 = scmp.lt.s32.totalorder %s27, 1
          %s695 = scalar_select %p694, %s27, 1
          %p696 = scmp.lt.s32.totalorder %s28, 1
          %s697 = scalar_select %p696, %s28, 1
          %s698 = smul.addr %s697, 2
          %s699 = smul.addr %s695, 4
          %s700 = sadd.s32 %s698, %s699
          %s701 = smul.addr %s700, 4
          %s702 = scalar_lea.vmem %s7, %s701
        $region113: #{_lambda_.2} parent=100 // pred_fallthru
          _
        // Predicated region
        $region114: #{_lambda_.2} parent=100 // pred_check
          %p703 = pneg %p255
        $region115: #{_lambda_.2} parent=100 // pred_check_branch
          %705 = sbr.rel (%p703) target = $region117
        $region116: #{_lambda_.2} parent=100 // pred_region
          %p706 = scmp.lt.s32.totalorder %s27, 1
          %s707 = scalar_select %p706, %s27, 1
          %p708 = scmp.lt.s32.totalorder %s28, 1
          %s709 = scalar_select %p708, %s28, 1
          %s710 = smul.addr %s709, 2
          %s711 = smul.addr %s707, 4
          %s712 = sadd.s32 %s710, %s711
          %s713 = smul.addr %s712, 8
          %s714 = scalar_lea.vmem %s8, %s713
        $region117: #{_lambda_.2} parent=100 // pred_fallthru
          _
        // Predicated region
        $region118: #{_lambda_.2} parent=100 // pred_check
          %p715 = pneg %p283
        $region119: #{_lambda_.2} parent=100 // pred_check_branch
          %717 = sbr.rel (%p715) target = $region121
        $region120: #{_lambda_.2} parent=100 // pred_region
          %p718 = scmp.lt.s32.totalorder %s27, 1
          %s719 = scalar_select %p718, %s27, 1
          %p720 = scmp.lt.s32.totalorder %s28, 1
          %s721 = scalar_select %p720, %s28, 1
          %s722 = smul.addr %s721, 2
          %s723 = smul.addr %s719, 4
          %s724 = sadd.s32 %s722, %s723
          %s725 = smul.addr %s724, 8
          %s726 = scalar_lea.vmem %s9, %s725
        $region121: #{_lambda_.2} parent=100 // pred_fallthru
          _
      $region101: #{_lambda_.2} parent=5 // pred_fallthru
        _
    $region6: #{_lambda_.2} parent=1 // loop_footer
      %s20 = sadd.s32 1, %s16
    $region7: #{_lambda_.2} parent=1 // loop_footer_branch
      %15 = sbr.rel target = $region3
    $region8: #{_lambda_.2} parent=1 // loop_exit
      _

// kernel: _lambda_.3
$region0: #{_lambda_.3}
  #allocation0 [shape = 'u32[]', space=smem, size = 0x4, offset = 0x4, fixed_abs, tag = 'smem constant byte address 0x4 - core index']
  #allocation1 [shape = 'u32[144,128]{1,0:T(1,128)}', space=vmem, size = 0x12000, scoped, tag = 'internal scratch']
  #allocation2 [shape = 'bf16[16,192]{1,0:T(8,128)(2,1)}', space=vmem, size = 0x2000, scoped, tag = 'scratch operand']
  %s0 = inlined_call_operand.vmem [shape: f32[2,4,256], index: 0, kind: input, shape index: {}]
  %s1 = inlined_call_operand.vmem [shape: bf16[2,16,256], index: 1, kind: input, shape index: {}]
  %s2 = inlined_call_operand.vmem [shape: bf16[2,2,16,16], index: 2, kind: input, shape index: {}]
  %s3 = inlined_call_operand.vmem [shape: bf16[2,2,16,16], index: 3, kind: input, shape index: {}]
  %s4 = inlined_call_operand.vmem [shape: f32[16,1], index: 4, kind: input, shape index: {}]
  %s5 = inlined_call_operand.vmem [shape: f32[16,1], index: 5, kind: input, shape index: {}]
  %s6 = inlined_call_operand.vmem [shape: bf16[9,4,16], index: 6, kind: input, shape index: {}]
  %s7 = inlined_call_operand.vmem [shape: f32[4,1], index: 7, kind: input, shape index: {}]
  %s8 = inlined_call_operand.vmem [shape: f32[2,8,256], index: 8, kind: output, shape index: {}]
  %s9 = sld [smem:[#allocation0]]
  $region106: #{_lambda_.3} parent=0
    _
  %s11 = ssub.s32 1, %s9
  %s12 = scalar_select 0, %s11, %s9
  $region1: #{_lambda_.3} parent=0
    #allocation3 [shape = 'u8[8192]{0}', space=vmem, size = 0x2000, scoped, tag = 'input window, operand 1']
    loop: start=0, step=1, limit=6
    $region2: #{_lambda_.3} parent=1 // loop_pre_header
      _
    $region3: #{_lambda_.3} parent=1 // loop_header
      %s14 = sphi 0, %s18
      %p15 = scmp.ge.s32.totalorder %s14, 6
      %s21 = sphi 0, %s33
      %s22 = sphi 0, %s29
      %s23 = sphi 0, %s21
      %s24 = sphi 0, %s22
      %s25 = sphi 0, %s23
      %s26 = sphi 0, %s24
      %s38 = sphi 0, %s40
      %s41 = sphi 0, %s38
      %s42 = sphi 0, %s41
      %s58 = sphi 0, %s42
      %s66 = sphi 0, %s68
      %s69 = sphi 0, %s66
      %s70 = sphi 0, %s69
      %s86 = sphi 0, %s70
      %s100 = sphi 0, %s102
      %s103 = sphi 0, %s100
      %s104 = sphi 0, %s103
      %s120 = sphi 0, %s104
      %s134 = sphi 0, %s136
      %s137 = sphi 0, %s134
      %s138 = sphi 0, %s137
      %s154 = sphi 0, %s138
      %s158 = sphi 0, %s158
      %s160 = sphi 0, %s158
      %s161 = sphi 0, %s160
      %s175 = sphi 0, %s161
      %s179 = sphi 0, %s179
      %s181 = sphi 0, %s179
      %s182 = sphi 0, %s181
      %s196 = sphi 0, %s182
      %s200 = sphi 0, %s200
      %s202 = sphi 0, %s200
      %s203 = sphi 0, %s202
      %s217 = sphi 0, %s203
      %s221 = sphi 0, %s221
      %s223 = sphi 0, %s221
      %s224 = sphi 0, %s223
      %s238 = sphi 0, %s224
      %s246 = sphi 0, %s248
      %s249 = sphi 0, %s246
      %s250 = sphi 0, %s249
      %s266 = sphi 0, %s250
    $region4: #{_lambda_.3} parent=1 // loop_header_branch
      %17 = sbr.rel (%p15) target = $region8
    $region5: #{_lambda_.3} parent=1 // loop_body
      %s19 = ssub.s32 %s14, 1
      %s20 = ssub.s32 %s14, 2
      %s27 = sadd.s32 1, %s22
      %p28 = scmp.ge.s32.totalorder %s27, 2
      %s29 = scalar_select %p28, 0, %s27
      %s30 = sadd.s32 1, %s21
      %s31 = scalar_select %p28, %s30, %s21
      %p32 = scmp.ge.s32.totalorder %s31, 2
      %s33 = scalar_select %p32, 0, %s31
      %s34 = ssub.s32 %s21, %s33
      %s35 = ssub.s32 %s22, %s29
      %s36 = sor.u32 %s34, %s35
      %p37 = scmp.eq.s32.totalorder %s36, 0
      %s39 = sadd.s32 %s38, 1
      %s40 = scalar_select %p37, %s38, %s39
      %p43 = pneg %p37
      %p44 = scmp.eq.s32.totalorder %s14, 3
      %p45 = por %p43, %p44
      %p46 = scmp.ne.s32.totalorder %s38, %s41
      %p47 = scmp.eq.s32.totalorder %s14, 0
      %p48 = por %p46, %p47
      %p49 = scmp.ne.s32.totalorder %s38, %s41
      %p50 = scmp.eq.s32.totalorder %s19, 3
      %p51 = por %p49, %p50
      %p52 = scmp.ne.s32.totalorder %s41, %s42
      %p53 = scmp.eq.s32.totalorder %s19, 0
      %p54 = por %p52, %p53
      %p55 = scmp.ne.s32.totalorder %s41, %s42
      %p56 = scmp.eq.s32.totalorder %s20, 3
      %p57 = por %p55, %p56
      %p59 = scmp.ne.s32.totalorder %s42, %s58
      %p60 = scmp.eq.s32.totalorder %s20, 0
      %p61 = por %p59, %p60
      %s62 = ssub.s32 %s21, %s33
      %s63 = ssub.s32 %s22, %s29
      %s64 = sor.u32 %s62, %s63
      %p65 = scmp.eq.s32.totalorder %s64, 0
      %s67 = sadd.s32 %s66, 1
      %s68 = scalar_select %p65, %s66, %s67
      %p71 = pneg %p65
      %p72 = scmp.eq.s32.totalorder %s14, 3
      %p73 = por %p71, %p72
      %p74 = scmp.ne.s32.totalorder %s66, %s69
      %p75 = scmp.eq.s32.totalorder %s14, 0
      %p76 = por %p74, %p75
      %p77 = scmp.ne.s32.totalorder %s66, %s69
      %p78 = scmp.eq.s32.totalorder %s19, 3
      %p79 = por %p77, %p78
      %p80 = scmp.ne.s32.totalorder %s69, %s70
      %p81 = scmp.eq.s32.totalorder %s19, 0
      %p82 = por %p80, %p81
      %p83 = scmp.ne.s32.totalorder %s69, %s70
      %p84 = scmp.eq.s32.totalorder %s20, 3
      %p85 = por %p83, %p84
      %p87 = scmp.ne.s32.totalorder %s70, %s86
      %p88 = scmp.eq.s32.totalorder %s20, 0
      %p89 = por %p87, %p88
      %s90 = ssub.s32 %s22, 1
      %p91 = scmp.gt.s32.totalorder %s90, 0
      %s92 = scalar_select %p91, %s90, 0
      %s93 = ssub.s32 %s29, 1
      %p94 = scmp.gt.s32.totalorder %s93, 0
      %s95 = scalar_select %p94, %s93, 0
      %s96 = ssub.s32 %s21, %s33
      %s97 = ssub.s32 %s92, %s95
      %s98 = sor.u32 %s96, %s97
      %p99 = scmp.eq.s32.totalorder %s98, 0
      %s101 = sadd.s32 %s100, 1
      %s102 = scalar_select %p99, %s100, %s101
      %p105 = pneg %p99
      %p106 = scmp.eq.s32.totalorder %s14, 3
      %p107 = por %p105, %p106
      %p108 = scmp.ne.s32.totalorder %s100, %s103
      %p109 = scmp.eq.s32.totalorder %s14, 0
      %p110 = por %p108, %p109
      %p111 = scmp.ne.s32.totalorder %s100, %s103
      %p112 = scmp.eq.s32.totalorder %s19, 3
      %p113 = por %p111, %p112
      %p114 = scmp.ne.s32.totalorder %s103, %s104
      %p115 = scmp.eq.s32.totalorder %s19, 0
      %p116 = por %p114, %p115
      %p117 = scmp.ne.s32.totalorder %s103, %s104
      %p118 = scmp.eq.s32.totalorder %s20, 3
      %p119 = por %p117, %p118
      %p121 = scmp.ne.s32.totalorder %s104, %s120
      %p122 = scmp.eq.s32.totalorder %s20, 0
      %p123 = por %p121, %p122
      %s124 = sadd.s32 %s22, 1
      %p125 = scmp.lt.s32.totalorder %s124, 1
      %s126 = scalar_select %p125, %s124, 1
      %s127 = sadd.s32 %s29, 1
      %p128 = scmp.lt.s32.totalorder %s127, 1
      %s129 = scalar_select %p128, %s127, 1
      %s130 = ssub.s32 %s21, %s33
      %s131 = ssub.s32 %s126, %s129
      %s132 = sor.u32 %s130, %s131
      %p133 = scmp.eq.s32.totalorder %s132, 0
      %s135 = sadd.s32 %s134, 1
      %s136 = scalar_select %p133, %s134, %s135
      %p139 = pneg %p133
      %p140 = scmp.eq.s32.totalorder %s14, 3
      %p141 = por %p139, %p140
      %p142 = scmp.ne.s32.totalorder %s134, %s137
      %p143 = scmp.eq.s32.totalorder %s14, 0
      %p144 = por %p142, %p143
      %p145 = scmp.ne.s32.totalorder %s134, %s137
      %p146 = scmp.eq.s32.totalorder %s19, 3
      %p147 = por %p145, %p146
      %p148 = scmp.ne.s32.totalorder %s137, %s138
      %p149 = scmp.eq.s32.totalorder %s19, 0
      %p150 = por %p148, %p149
      %p151 = scmp.ne.s32.totalorder %s137, %s138
      %p152 = scmp.eq.s32.totalorder %s20, 3
      %p153 = por %p151, %p152
      %p155 = scmp.ne.s32.totalorder %s138, %s154
      %p156 = scmp.eq.s32.totalorder %s20, 0
      %p157 = por %p155, %p156
      %s159 = sadd.s32 %s158, 1
      %p162 = scmp.eq.s32.totalorder %s14, 3
      %p163 = scmp.ne.s32.totalorder %s158, %s160
      %p164 = scmp.eq.s32.totalorder %s14, 0
      %p165 = por %p163, %p164
      %p166 = scmp.ne.s32.totalorder %s158, %s160
      %p167 = scmp.eq.s32.totalorder %s19, 3
      %p168 = por %p166, %p167
      %p169 = scmp.ne.s32.totalorder %s160, %s161
      %p170 = scmp.eq.s32.totalorder %s19, 0
      %p171 = por %p169, %p170
      %p172 = scmp.ne.s32.totalorder %s160, %s161
      %p173 = scmp.eq.s32.totalorder %s20, 3
      %p174 = por %p172, %p173
      %p176 = scmp.ne.s32.totalorder %s161, %s175
      %p177 = scmp.eq.s32.totalorder %s20, 0
      %p178 = por %p176, %p177
      %s180 = sadd.s32 %s179, 1
      %p183 = scmp.eq.s32.totalorder %s14, 3
      %p184 = scmp.ne.s32.totalorder %s179, %s181
      %p185 = scmp.eq.s32.totalorder %s14, 0
      %p186 = por %p184, %p185
      %p187 = scmp.ne.s32.totalorder %s179, %s181
      %p188 = scmp.eq.s32.totalorder %s19, 3
      %p189 = por %p187, %p188
      %p190 = scmp.ne.s32.totalorder %s181, %s182
      %p191 = scmp.eq.s32.totalorder %s19, 0
      %p192 = por %p190, %p191
      %p193 = scmp.ne.s32.totalorder %s181, %s182
      %p194 = scmp.eq.s32.totalorder %s20, 3
      %p195 = por %p193, %p194
      %p197 = scmp.ne.s32.totalorder %s182, %s196
      %p198 = scmp.eq.s32.totalorder %s20, 0
      %p199 = por %p197, %p198
      %s201 = sadd.s32 %s200, 1
      %p204 = scmp.eq.s32.totalorder %s14, 3
      %p205 = scmp.ne.s32.totalorder %s200, %s202
      %p206 = scmp.eq.s32.totalorder %s14, 0
      %p207 = por %p205, %p206
      %p208 = scmp.ne.s32.totalorder %s200, %s202
      %p209 = scmp.eq.s32.totalorder %s19, 3
      %p210 = por %p208, %p209
      %p211 = scmp.ne.s32.totalorder %s202, %s203
      %p212 = scmp.eq.s32.totalorder %s19, 0
      %p213 = por %p211, %p212
      %p214 = scmp.ne.s32.totalorder %s202, %s203
      %p215 = scmp.eq.s32.totalorder %s20, 3
      %p216 = por %p214, %p215
      %p218 = scmp.ne.s32.totalorder %s203, %s217
      %p219 = scmp.eq.s32.totalorder %s20, 0
      %p220 = por %p218, %p219
      %s222 = sadd.s32 %s221, 1
      %p225 = scmp.eq.s32.totalorder %s14, 3
      %p226 = scmp.ne.s32.totalorder %s221, %s223
      %p227 = scmp.eq.s32.totalorder %s14, 0
      %p228 = por %p226, %p227
      %p229 = scmp.ne.s32.totalorder %s221, %s223
      %p230 = scmp.eq.s32.totalorder %s19, 3
      %p231 = por %p229, %p230
      %p232 = scmp.ne.s32.totalorder %s223, %s224
      %p233 = scmp.eq.s32.totalorder %s19, 0
      %p234 = por %p232, %p233
      %p235 = scmp.ne.s32.totalorder %s223, %s224
      %p236 = scmp.eq.s32.totalorder %s20, 3
      %p237 = por %p235, %p236
      %p239 = scmp.ne.s32.totalorder %s224, %s238
      %p240 = scmp.eq.s32.totalorder %s20, 0
      %p241 = por %p239, %p240
      %s242 = ssub.s32 %s21, %s33
      %s243 = ssub.s32 %s22, %s29
      %s244 = sor.u32 %s242, %s243
      %p245 = scmp.eq.s32.totalorder %s244, 0
      %s247 = sadd.s32 %s246, 1
      %s248 = scalar_select %p245, %s246, %s247
      %p251 = pneg %p245
      %p252 = scmp.eq.s32.totalorder %s14, 3
      %p253 = por %p251, %p252
      %p254 = scmp.ne.s32.totalorder %s246, %s249
      %p255 = scmp.eq.s32.totalorder %s14, 0
      %p256 = por %p254, %p255
      %p257 = scmp.ne.s32.totalorder %s246, %s249
      %p258 = scmp.eq.s32.totalorder %s19, 3
      %p259 = por %p257, %p258
      %p260 = scmp.ne.s32.totalorder %s249, %s250
      %p261 = scmp.eq.s32.totalorder %s19, 0
      %p262 = por %p260, %p261
      %p263 = scmp.ne.s32.totalorder %s249, %s250
      %p264 = scmp.eq.s32.totalorder %s20, 3
      %p265 = por %p263, %p264
      %p267 = scmp.ne.s32.totalorder %s250, %s266
      %p268 = scmp.eq.s32.totalorder %s20, 0
      %p269 = por %p267, %p268
      %p270 = scmp.le.s32.totalorder 1, %s14
      %p271 = scmp.lt.s32.totalorder %s14, 5
      %p272 = pnand %p270, %p271
      %p273 = pneg %p272
      // Predicated region
      $region9: #{_lambda_.3} parent=5 // pred_check
        _
      $region10: #{_lambda_.3} parent=5 // pred_check_branch
        %275 = sbr.rel (%p272) target = $region12
      $region11: #{_lambda_.3} parent=5 // pred_region
        %s276 = ssub.s32 %s14, 1
        // Predicated region
        $region13: #{_lambda_.3} parent=11 // pred_check
          %p277 = pneg %p171
        $region14: #{_lambda_.3} parent=11 // pred_check_branch
          %279 = sbr.rel (%p277) target = $region16
        $region15: #{_lambda_.3} parent=11 // pred_region
          _
        $region16: #{_lambda_.3} parent=11 // pred_fallthru
          _
        // Predicated region
        $region17: #{_lambda_.3} parent=11 // pred_check
          %p280 = pneg %p192
        $region18: #{_lambda_.3} parent=11 // pred_check_branch
          %282 = sbr.rel (%p280) target = $region20
        $region19: #{_lambda_.3} parent=11 // pred_region
          _
        $region20: #{_lambda_.3} parent=11 // pred_fallthru
          _
        // Predicated region
        $region21: #{_lambda_.3} parent=11 // pred_check
          %p283 = pneg %p213
        $region22: #{_lambda_.3} parent=11 // pred_check_branch
          %285 = sbr.rel (%p283) target = $region24
        $region23: #{_lambda_.3} parent=11 // pred_region
          _
        $region24: #{_lambda_.3} parent=11 // pred_fallthru
          _
        // Predicated region
        $region25: #{_lambda_.3} parent=11 // pred_check
          %p286 = pneg %p234
        $region26: #{_lambda_.3} parent=11 // pred_check_branch
          %288 = sbr.rel (%p286) target = $region28
        $region27: #{_lambda_.3} parent=11 // pred_region
          _
        $region28: #{_lambda_.3} parent=11 // pred_fallthru
          _
      $region12: #{_lambda_.3} parent=5 // pred_fallthru
        _
      %p289 = scmp.lt.s32.totalorder %s14, 4
      // Predicated region
      $region29: #{_lambda_.3} parent=5 // pred_check
        %p290 = pneg %p289
      $region30: #{_lambda_.3} parent=5 // pred_check_branch
        %292 = sbr.rel (%p290) target = $region32
      $region31: #{_lambda_.3} parent=5 // pred_region
        // Predicated region
        $region33: #{_lambda_.3} parent=31 // pred_check
          %p293 = pneg %p48
        $region34: #{_lambda_.3} parent=31 // pred_check_branch
          %295 = sbr.rel (%p293) target = $region36
        $region35: #{_lambda_.3} parent=31 // pred_region
          %p296 = scmp.lt.s32.totalorder %s21, 1
          %s297 = scalar_select %p296, %s21, 1
          %p298 = scmp.lt.s32.totalorder %s22, 1
          %s299 = scalar_select %p298, %s22, 1
          %s300 = smul.addr %s297, 2
          %s301 = sadd.s32 %s299, %s300
          %s302 = smul.addr %s301, 4
          %s303 = scalar_lea.vmem %s0, %s302
        $region36: #{_lambda_.3} parent=31 // pred_fallthru
          _
        // Predicated region
        $region37: #{_lambda_.3} parent=31 // pred_check
          %p304 = pneg %p76
        $region38: #{_lambda_.3} parent=31 // pred_check_branch
          %306 = sbr.rel (%p304) target = $region40
        $region39: #{_lambda_.3} parent=31 // pred_region
          %s307 = sand.u32 %s66, 1
          %s308 = sand.u32 %s66, 1
          %s309 = smul.addr %s308, 8
          %s310 = scalar_lea.vmem [#allocation3], %s309
          %s311 = smul.addr %s21, 4
          %s312 = sadd.s32 %s22, %s311
          %s313 = smul.addr %s312, 4
          %s314 = scalar_lea.vmem %s1, %s313
          // Predicated region
          $region41: #{_lambda_.3} parent=39 // pred_check
            _
          $region42: #{_lambda_.3} parent=39 // pred_check_branch
            %316 = sbr.rel (0) target = $region44
          $region43: #{_lambda_.3} parent=39 // pred_region
            // Predicated region
            $region45: #{_lambda_.3} parent=43 // pred_check
              _
            $region46: #{_lambda_.3} parent=43 // pred_check_branch
              %318 = sbr.rel target = $region48
            $region47: #{_lambda_.3} parent=43 // pred_region
              // Predicated region
              $region60: #{_lambda_.3} parent=47 // pred_check
                _
              $region61: #{_lambda_.3} parent=47 // pred_check_branch
                %336 = sbr.rel (0) target = $region63
              $region62: #{_lambda_.3} parent=47 // pred_region
                loop: start=0, step=1, limit=1
                $region64: #{_lambda_.3} parent=62 // loop_pre_header
                  _
                $region65: #{_lambda_.3} parent=62 // loop_header
                  %s338 = sphi 0, %s342
                  %p339 = scmp.ge.s32.totalorder %s338, 1
                  %s343 = sphi %s314, %s314
                  %s344 = sphi %s310, %s310
                $region66: #{_lambda_.3} parent=62 // loop_header_branch
                  %341 = sbr.rel (%p339) target = $region70
                $region67: #{_lambda_.3} parent=62 // loop_body
                  _
                $region68: #{_lambda_.3} parent=62 // loop_footer
                  %s342 = sadd.s32 1, %s338
                $region69: #{_lambda_.3} parent=62 // loop_footer_branch
                  %337 = sbr.rel target = $region65
                $region70: #{_lambda_.3} parent=62 // loop_exit
                  _
                %s346 = ssub.s32 16, 1
                loop: start=0, step=1, limit=1
                $region71: #{_lambda_.3} parent=62 // loop_pre_header
                  _
                $region72: #{_lambda_.3} parent=62 // loop_header
                  %s348 = sphi 0, %s352
                  %p349 = scmp.ge.s32.totalorder %s348, 1
                  %s353 = sphi %s314, %s314
                  %s354 = sphi %s310, %s310
                $region73: #{_lambda_.3} parent=62 // loop_header_branch
                  %351 = sbr.rel (%p349) target = $region77
                $region74: #{_lambda_.3} parent=62 // loop_body
                  %v355 = vld [vmem:[%s353] sm:%s346]
                  %356 = vst [vmem:[%s354] sm:%s346] %v355
                  %v357 = vld [vmem:[%s353 + $0x8] sm:%s346]
                  %358 = vst [vmem:[%s354 + $0x4] sm:%s346] %v357
                $region75: #{_lambda_.3} parent=62 // loop_footer
                  %s352 = sadd.s32 1, %s348
                $region76: #{_lambda_.3} parent=62 // loop_footer_branch
                  %347 = sbr.rel target = $region72
                $region77: #{_lambda_.3} parent=62 // loop_exit
                  _
              $region63: #{_lambda_.3} parent=47 // pred_fallthru
                _
            $region48: #{_lambda_.3} parent=43 // pred_fallthru
              _
            // Predicated region
            $region49: #{_lambda_.3} parent=43 // pred_check
              _
            $region50: #{_lambda_.3} parent=43 // pred_check_branch
              %320 = sbr.rel (0) target = $region52
            $region51: #{_lambda_.3} parent=43 // pred_region
              %s322 = ssub.s32 16, 1
              loop: start=0, step=1, limit=1
              $region53: #{_lambda_.3} parent=51 // loop_pre_header
                _
              $region54: #{_lambda_.3} parent=51 // loop_header
                %s324 = sphi 0, %s328
                %p325 = scmp.ge.s32.totalorder %s324, 1
                %s329 = sphi %s314, %s314
                %s330 = sphi %s310, %s310
              $region55: #{_lambda_.3} parent=51 // loop_header_branch
                %327 = sbr.rel (%p325) target = $region59
              $region56: #{_lambda_.3} parent=51 // loop_body
                %v331 = vld [vmem:[%s329] sm:%s322]
                %332 = vst [vmem:[%s330] sm:%s322] %v331
                %v333 = vld [vmem:[%s329 + $0x8] sm:%s322]
                %334 = vst [vmem:[%s330 + $0x4] sm:%s322] %v333
              $region57: #{_lambda_.3} parent=51 // loop_footer
                %s328 = sadd.s32 1, %s324
              $region58: #{_lambda_.3} parent=51 // loop_footer_branch
                %323 = sbr.rel target = $region54
              $region59: #{_lambda_.3} parent=51 // loop_exit
                _
            $region52: #{_lambda_.3} parent=43 // pred_fallthru
              _
          $region44: #{_lambda_.3} parent=39 // pred_fallthru
            _
          %359 = vnop
        $region40: #{_lambda_.3} parent=31 // pred_fallthru
          _
        // Predicated region
        $region78: #{_lambda_.3} parent=31 // pred_check
          %p360 = pneg %p110
        $region79: #{_lambda_.3} parent=31 // pred_check_branch
          %362 = sbr.rel (%p360) target = $region81
        $region80: #{_lambda_.3} parent=31 // pred_region
          %s363 = ssub.s32 %s22, 1
          %p364 = scmp.gt.s32.totalorder %s363, 0
          %s365 = scalar_select %p364, %s363, 0
          %p366 = scmp.lt.s32.totalorder %s21, 1
          %s367 = scalar_select %p366, %s21, 1
          %p368 = scmp.lt.s32.totalorder %s365, 1
          %s369 = scalar_select %p368, %s365, 1
          %s370 = smul.addr %s369, 2
          %s371 = smul.addr %s367, 4
          %s372 = sadd.s32 %s370, %s371
          %s373 = smul.addr %s372, 4
          %s374 = scalar_lea.vmem %s2, %s373
          %s375 = ssub.s32 %s22, 1
          %p376 = scmp.gt.s32.totalorder %s375, 0
          %s377 = scalar_select %p376, %s375, 0
        $region81: #{_lambda_.3} parent=31 // pred_fallthru
          _
        // Predicated region
        $region82: #{_lambda_.3} parent=31 // pred_check
          %p378 = pneg %p144
        $region83: #{_lambda_.3} parent=31 // pred_check_branch
          %380 = sbr.rel (%p378) target = $region85
        $region84: #{_lambda_.3} parent=31 // pred_region
          %s381 = sadd.s32 %s22, 1
          %p382 = scmp.lt.s32.totalorder %s381, 1
          %s383 = scalar_select %p382, %s381, 1
          %p384 = scmp.lt.s32.totalorder %s21, 1
          %s385 = scalar_select %p384, %s21, 1
          %p386 = scmp.lt.s32.totalorder %s383, 1
          %s387 = scalar_select %p386, %s383, 1
          %s388 = smul.addr %s387, 2
          %s389 = smul.addr %s385, 4
          %s390 = sadd.s32 %s388, %s389
          %s391 = smul.addr %s390, 4
          %s392 = scalar_lea.vmem %s3, %s391
          %s393 = sadd.s32 %s22, 1
          %p394 = scmp.lt.s32.totalorder %s393, 1
          %s395 = scalar_select %p394, %s393, 1
        $region85: #{_lambda_.3} parent=31 // pred_fallthru
          _
      $region32: #{_lambda_.3} parent=5 // pred_fallthru
        _
      %p396 = scmp.le.s32.totalorder 1, %s14
      %p397 = scmp.lt.s32.totalorder %s14, 5
      %p398 = pnand %p396, %p397
      %p399 = pneg %p398
      // Predicated region
      $region86: #{_lambda_.3} parent=5 // pred_check
        _
      $region87: #{_lambda_.3} parent=5 // pred_check_branch
        %401 = sbr.rel (%p398) target = $region89
      $region88: #{_lambda_.3} parent=5 // pred_region
        %s402 = ssub.s32 %s14, 1
        %s403 = sand.u32 %s69, 1
        %s404 = sand.u32 %s69, 1
        %s405 = smul.addr %s404, 8
        %s406 = scalar_lea.vmem [#allocation3], %s405
        // Predicated region
        $region90: #{_lambda_.3} parent=88 // pred_check
          %p407 = pneg %p82
        $region91: #{_lambda_.3} parent=88 // pred_check_branch
          %409 = sbr.rel (%p407) target = $region93
        $region92: #{_lambda_.3} parent=88 // pred_region
          _
        $region93: #{_lambda_.3} parent=88 // pred_fallthru
          _
        %p410 = scmp.lt.s32.totalorder %s23, 1
        %s411 = scalar_select %p410, %s23, 1
        %p412 = scmp.lt.s32.totalorder %s24, 1
        %s413 = scalar_select %p412, %s24, 1
        %s414 = smul.addr %s411, 2
        %s415 = sadd.s32 %s413, %s414
        %s416 = smul.addr %s415, 4
        %s417 = scalar_lea.vmem %s0, %s416
        %p418 = pneg %p54
        %p419 = pneg %p51
        %s420 = sand.u32 %s69, 1
        %s421 = sand.u32 %s69, 1
        %s422 = smul.addr %s421, 8
        %s423 = scalar_lea.vmem [#allocation3], %s422
        %p424 = pneg %p82
        %p425 = pneg %p79
        %s426 = ssub.s32 %s24, 1
        %p427 = scmp.gt.s32.totalorder %s426, 0
        %s428 = scalar_select %p427, %s426, 0
        %p429 = scmp.lt.s32.totalorder %s23, 1
        %s430 = scalar_select %p429, %s23, 1
        %p431 = scmp.lt.s32.totalorder %s428, 1
        %s432 = scalar_select %p431, %s428, 1
        %s433 = smul.addr %s432, 2
        %s434 = smul.addr %s430, 4
        %s435 = sadd.s32 %s433, %s434
        %s436 = smul.addr %s435, 4
        %s437 = scalar_lea.vmem %s2, %s436
        %p438 = pneg %p116
        %p439 = pneg %p113
        %s440 = sadd.s32 %s24, 1
        %p441 = scmp.lt.s32.totalorder %s440, 1
        %s442 = scalar_select %p441, %s440, 1
        %p443 = scmp.lt.s32.totalorder %s23, 1
        %s444 = scalar_select %p443, %s23, 1
        %p445 = scmp.lt.s32.totalorder %s442, 1
        %s446 = scalar_select %p445, %s442, 1
        %s447 = smul.addr %s446, 2
        %s448 = smul.addr %s444, 4
        %s449 = sadd.s32 %s447, %s448
        %s450 = smul.addr %s449, 4
        %s451 = scalar_lea.vmem %s3, %s450
        %p452 = pneg %p150
        %p453 = pneg %p147
        %p454 = pneg %p171
        %p455 = pneg %p168
        %p456 = pneg %p192
        %p457 = pneg %p189
        %p458 = pneg %p213
        %p459 = pneg %p210
        %p460 = pneg %p234
        %p461 = pneg %p231
        %p462 = pneg %p262
        %p463 = pneg %p259
        %p464 = scmp.lt.s32.totalorder %s23, 1
        %s465 = scalar_select %p464, %s23, 1
        %p466 = scmp.lt.s32.totalorder %s24, 1
        %s467 = scalar_select %p466, %s24, 1
        %s468 = smul.addr %s465, 2
        %s469 = sadd.s32 %s467, %s468
        %s470 = smul.addr %s469, 8
        %s471 = scalar_lea.vmem %s8, %s470
        %p472 = scmp.lt.s32.totalorder %s23, 1
        %s473 = scalar_select %p472, %s23, 1
        %p474 = scmp.lt.s32.totalorder %s24, 1
        %s475 = scalar_select %p474, %s24, 1
        %s476 = smul.addr %s473, 2
        %s477 = sadd.s32 %s475, %s476
        %s478 = smul.addr %s477, 4
        %s479 = scalar_lea.vmem %s0, %s478
        %s480 = ssub.s32 %s24, 1
        %p481 = scmp.gt.s32.totalorder %s480, 0
        %s482 = scalar_select %p481, %s480, 0
        %p483 = scmp.lt.s32.totalorder %s23, 1
        %s484 = scalar_select %p483, %s23, 1
        %p485 = scmp.lt.s32.totalorder %s482, 1
        %s486 = scalar_select %p485, %s482, 1
        %s487 = smul.addr %s486, 2
        %s488 = smul.addr %s484, 4
        %s489 = sadd.s32 %s487, %s488
        %s490 = smul.addr %s489, 4
        %s491 = scalar_lea.vmem %s2, %s490
        %s492 = ssub.s32 %s24, 1
        %p493 = scmp.gt.s32.totalorder %s492, 0
        %s494 = scalar_select %p493, %s492, 0
        %s495 = sadd.s32 %s24, 1
        %p496 = scmp.lt.s32.totalorder %s495, 1
        %s497 = scalar_select %p496, %s495, 1
        %p498 = scmp.lt.s32.totalorder %s23, 1
        %s499 = scalar_select %p498, %s23, 1
        %p500 = scmp.lt.s32.totalorder %s497, 1
        %s501 = scalar_select %p500, %s497, 1
        %s502 = smul.addr %s501, 2
        %s503 = smul.addr %s499, 4
        %s504 = sadd.s32 %s502, %s503
        %s505 = smul.addr %s504, 4
        %s506 = scalar_lea.vmem %s3, %s505
        %s507 = sadd.s32 %s24, 1
        %p508 = scmp.lt.s32.totalorder %s507, 1
        %s509 = scalar_select %p508, %s507, 1
        %p510 = scmp.lt.s32.totalorder %s23, 1
        %s511 = scalar_select %p510, %s23, 1
        %p512 = scmp.lt.s32.totalorder %s24, 1
        %s513 = scalar_select %p512, %s24, 1
        %s514 = smul.addr %s511, 2
        %s515 = sadd.s32 %s513, %s514
        %s516 = smul.addr %s515, 8
        %s517 = scalar_lea.vmem %s8, %s516
        %v521 = vld [vmem:[%s4] sm:$0xff]
        %v522 = vld [vmem:[%s4 + $0x8] sm:$0xff]
        %v523 = vld [vmem:[%s5] sm:$0xff]
        %v524 = vld [vmem:[%s5 + $0x8] sm:$0xff]
        %v525 = vld [vmem:[%s406] sm:$0xf]
        %v526 = vld [vmem:[%s406 + $0x4] sm:$0xf]
        %v527 = vunpack.c.l.bf16 %v525
        %v528 = vunpack.c.l.bf16 %v526
        %530 = vset.pattern.permute.xlu0 0
        %531 = vperm.xlu0 %530, %v521
        %v532 = vpop.permute.xlu0 %531
        %535 = vset.pattern.permute.xlu0 0
        %536 = vperm.xlu0 %535, %v522
        %v537 = vpop.permute.xlu0 %536
        %v539 = vmul.f32 %v527, %v532
        %v540 = vmul.f32 %v528, %v537
        %542 = vset.pattern.permute.xlu0 0
        %543 = vperm.xlu0 %542, %v523
        %v544 = vpop.permute.xlu0 %543
        %547 = vset.pattern.permute.xlu0 0
        %548 = vperm.xlu0 %547, %v524
        %v549 = vpop.permute.xlu0 %548
        %v551 = vadd.f32 %v539, %v544
        %v552 = vadd.f32 %v540, %v549
        %v553 = vmax.f32 %v551, 0.0
        %v554 = vmax.f32 %v552, 0.0
        %v555 = vpack.c.bf16 %v554, %v553
        %v557 = vunpack.c.l.b16 %v555
        %v558 = vunpack.c.h.b16 %v555
        %v559 = vpack.c.b16 %v557, %v557
        %v560 = vpack.c.b16 %v558, %v558
        %561 = vrot.lane.b32.xlu0 %v559, 32
        %v562 = vpop.permute.xlu0 %561
        %563 = vrot.lane.b32.xlu0 %v560, 32
        %v564 = vpop.permute.xlu0 %563
        %v565 = vrot.slane %v562, 4
        %v566 = vrot.slane %v564, 4
        %vm567 = vcmask 261120
        %v568 = vsel %vm567, %v565, %v562
        %v569 = vsel %vm567, %v566, %v564
        %vm572 = vcmask 1043712
        %vm573 = vcmask 261124
        %vm574 = vmor %vm573, %vm572
        %575 = vst.msk [vmem:[#allocation2] sm:$0xff] %vm574, %v568
        %576 = vst.msk [vmem:[#allocation2 + $0x8] sm:$0xff] %vm574, %v569
        %p577 = scmp.gt.s32.totalorder %s24, 0
        %s578 = scalar_select %p577, 1, 0
        %s579 = scvt.s32.f32 %s578
        %p580 = scmp.lt.s32.totalorder %s24, 1
        %s581 = scalar_select %p580, 1, 0
        %s582 = scvt.s32.f32 %s581
        %v583 = vld [vmem:[%s491] sm:$0xf]
        %v584 = vld [vmem:[%s491 + $0x4] sm:$0xf]
        %v585 = vunpack.c.l.bf16 %v583
        %v586 = vunpack.c.l.bf16 %v584
        %v587 = vmul.f32 %v585, %v532
        %v588 = vmul.f32 %v586, %v537
        %v589 = vadd.f32 %v587, %v544
        %v590 = vadd.f32 %v588, %v549
        %v591 = vmax.f32 %v589, 0.0
        %v592 = vmax.f32 %v590, 0.0
        %v593 = vstv %s579
        %v594 = vmul.f32 %v591, %v593
        %v595 = vmul.f32 %v592, %v593
        %v596 = vld [vmem:[%s506] sm:$0xf]
        %v597 = vld [vmem:[%s506 + $0x4] sm:$0xf]
        %v598 = vunpack.c.l.bf16 %v596
        %v599 = vunpack.c.l.bf16 %v597
        %v600 = vmul.f32 %v598, %v532
        %v601 = vmul.f32 %v599, %v537
        %v602 = vadd.f32 %v600, %v544
        %v603 = vadd.f32 %v601, %v549
        %v604 = vmax.f32 %v602, 0.0
        %v605 = vmax.f32 %v603, 0.0
        %v606 = vstv %s582
        %v607 = vmul.f32 %v604, %v606
        %v608 = vmul.f32 %v605, %v606
        %v609 = vpack.c.bf16 %v595, %v594
        %v611 = vunpack.c.l.b16 %v609
        %v612 = vunpack.c.h.b16 %v609
        %v613 = vpack.c.b16 %v611, %v611
        %v614 = vpack.c.b16 %v612, %v612
        %615 = vrot.lane.b32.xlu0 %v613, 16
        %v616 = vpop.permute.xlu0 %615
        %617 = vrot.lane.b32.xlu0 %v614, 16
        %v618 = vpop.permute.xlu0 %617
        %vm621 = vcmask 257152
        %622 = vst.msk [vmem:[#allocation2] sm:$0xf] %vm621, %v616
        %623 = vst.msk [vmem:[#allocation2 + $0x8] sm:$0xf] %vm621, %v618
        %v624 = vpack.c.bf16 %v608, %v607
        %v626 = vunpack.c.l.b16 %v624
        %v627 = vunpack.c.h.b16 %v624
        %v628 = vpack.c.b16 %v626, %v626
        %v629 = vpack.c.b16 %v627, %v627
        %630 = vrot.lane.b32.xlu0 %v628, 32
        %v631 = vpop.permute.xlu0 %630
        %632 = vrot.lane.b32.xlu0 %v629, 32
        %v633 = vpop.permute.xlu0 %632
        %vm636 = vcmask 388352
        %637 = vst.msk [vmem:[#allocation2 + $0x4] sm:$0xf] %vm636, %v631
        %638 = vst.msk [vmem:[#allocation2 + $0xc] sm:$0xf] %vm636, %v633
        %v639 = vlaneseq
        %v640 = vand.u32 %v639, 127
        %vm641 = vcmp.lt.s32.totalorder %v640, 0
        %v642 = vsub.s32 0, %v640
        %v643 = vsel %vm641, %v642, %v640
        %v644 = vshrl.u32 %v643, 4
        %v645 = vand.u32 %v643, 15
        %v646 = vsub.s32 0, %v645
        %v647 = vsel %vm641, %v646, %v645
        %vm648 = vcmp.ne.s32.totalorder %v647, 0
        %vm649 = vcmp.lt.s32.totalorder %v647, 0
        %vm650 = vmand %vm649, %vm648
        %v651 = vadd.s32 %v647, 16
        %v652 = vsel %vm650, %v651, %v647
        %vm653 = vcmp.ne.s32.totalorder %v652, 0
        %vm654 = vcmp.ne.s32.totalorder %v652, 15
        %v655 = vld [vmem:[#allocation2] sm:$0xff]
        %v656 = vld [vmem:[#allocation2 + $0x8] sm:$0xff]
        %vm657 = vmpackc.low %vm653, %vm653
        %v658 = vsel %vm657, 65537, 0
        %659 = vrot.lane.b32.xlu0 %v658, 15
        %v660 = vpop.permute.xlu0 %659
        %v661 = vrot.slane %v660, 4
        %vm662 = vcmask 121856
        %v663 = vsel %vm662, %v661, %v660
        %vm664 = vcmp.ne.s16.totalorder %v663, 0
        %v665 = vsel %vm664, %v655, 0
        %v666 = vsel %vm664, %v656, 0
        %v667 = vld [vmem:[%s6] sm:$0x3]
        %s668 = scalar_lea.vmem %s6, 2
        %v669 = vld [vmem:[%s668] sm:$0x3]
        %v672 = vunpack.c.l.b16 %v655
        %v673 = vunpack.c.h.b16 %v655
        %v674 = vunpack.c.l.b16 %v656
        %v675 = vunpack.c.h.b16 %v656
        %v676 = vpack.c.b16 %v674, %v672
        %v677 = vpack.c.b16 %v675, %v673
        %678 = vrot.lane.b32.xlu0 %v676, 112
        %v679 = vpop.permute.xlu0 %678
        %680 = vrot.lane.b32.xlu0 %v677, 112
        %v681 = vpop.permute.xlu0 %680
        %vm682 = vcmask 916480
        %v683 = vsel %vm682, %v679, %v681
        %vm685 = vcmask 130048
        %v687 = vsel %vm685, %v669, 0
        %689 = vmatprep.subr.bf16.mxu0 0
        %690 = vmatpush1.bf16.msra.mxu0 0
        %691 = vmatprep.subr.bf16.mxu0 0
        %692 = vmatpush1.bf16.msra.mxu0 0
        %693 = vmatprep.subr.bf16.mxu0 0
        %694 = vmatpush1.bf16.msra.mxu0 0
        %695 = vmatprep.subr.bf16.mxu0 0
        %696 = vmatpush1.bf16.msra.mxu0 0
        %697 = vmatprep.subr.bf16.mxu0 0
        %698 = vmatpush1.bf16.msra.mxu0 0
        %699 = vmatprep.subr.bf16.mxu0 0
        %700 = vmatpush1.bf16.msra.mxu0 0
        %701 = vmatprep.subr.bf16.mxu0 0
        %702 = vmatpush1.bf16.msra.mxu0 0
        %703 = vmatprep.subr.bf16.mxu0 0
        %704 = vmatpush1.bf16.msra.mxu0 %v683
        %705 = vmatprep.subr.bf16.mxu0 0
        %706 = vmatpush2.bf16.msra.mxu0 0
        %707 = vmatprep.subr.bf16.mxu0 0
        %708 = vmatpush2.bf16.msra.mxu0 0
        %709 = vmatprep.subr.bf16.mxu0 0
        %710 = vmatpush2.bf16.msra.mxu0 0
        %711 = vmatprep.subr.bf16.mxu0 0
        %712 = vmatpush2.bf16.msra.mxu0 0
        %713 = vmatprep.subr.bf16.mxu0 0
        %714 = vmatpush2.bf16.msra.mxu0 0
        %715 = vmatprep.subr.bf16.mxu0 0
        %716 = vmatpush2.bf16.msra.mxu0 0
        %717 = vmatprep.subr.bf16.mxu0 0
        %718 = vmatpush2.bf16.msra.mxu0 0
        %719 = vmatprep.subr.bf16.mxu0 0
        %720 = vmatpush2.bf16.msra.mxu0 0
        %721 = vmatprep.mubr.bf16.mxu0 0
        %722 = vmatmul.mubr.bf16.gmra.mxu0 %v687
        %v723 = vpop.f32.mrf.mxu0
        %v724 = vadd.f32 0.0, %v723
        %v725 = vpop.f32.mrf.mxu0
        %v726 = vpop.f32.mrf.mxu0
        %v727 = vpop.f32.mrf.mxu0
        %728 = vdwg.mxu0
        %v731 = vunpack.c.l.b16 %v665
        %v732 = vunpack.c.h.b16 %v665
        %v733 = vunpack.c.l.b16 %v666
        %v734 = vunpack.c.h.b16 %v666
        %v735 = vpack.c.b16 %v733, %v731
        %v736 = vpack.c.b16 %v734, %v732
        %737 = vrot.lane.b32.xlu0 %v735, 113
        %v738 = vpop.permute.xlu0 %737
        %739 = vrot.lane.b32.xlu0 %v736, 113
        %v740 = vpop.permute.xlu0 %739
        %vm741 = vcmask 924672
        %v742 = vsel %vm741, %v738, %v740
        %v745 = vsel %vm685, %v667, 0
        %747 = vmatprep.subr.bf16.mxu0 0
        %748 = vmatpush1.bf16.msra.mxu0 0
        %749 = vmatprep.subr.bf16.mxu0 0
        %750 = vmatpush1.bf16.msra.mxu0 0
        %751 = vmatprep.subr.bf16.mxu0 0
        %752 = vmatpush1.bf16.msra.mxu0 0
        %753 = vmatprep.subr.bf16.mxu0 0
        %754 = vmatpush1.bf16.msra.mxu0 0
        %755 = vmatprep.subr.bf16.mxu0 0
        %756 = vmatpush1.bf16.msra.mxu0 0
        %757 = vmatprep.subr.bf16.mxu0 0
        %758 = vmatpush1.bf16.msra.mxu0 0
        %759 = vmatprep.subr.bf16.mxu0 0
        %760 = vmatpush1.bf16.msra.mxu0 0
        %761 = vmatprep.subr.bf16.mxu0 0
        %762 = vmatpush1.bf16.msra.mxu0 %v742
        %763 = vmatprep.subr.bf16.mxu0 0
        %764 = vmatpush2.bf16.msra.mxu0 0
        %765 = vmatprep.subr.bf16.mxu0 0
        %766 = vmatpush2.bf16.msra.mxu0 0
        %767 = vmatprep.subr.bf16.mxu0 0
        %768 = vmatpush2.bf16.msra.mxu0 0
        %769 = vmatprep.subr.bf16.mxu0 0
        %770 = vmatpush2.bf16.msra.mxu0 0
        %771 = vmatprep.subr.bf16.mxu0 0
        %772 = vmatpush2.bf16.msra.mxu0 0
        %773 = vmatprep.subr.bf16.mxu0 0
        %774 = vmatpush2.bf16.msra.mxu0 0
        %775 = vmatprep.subr.bf16.mxu0 0
        %776 = vmatpush2.bf16.msra.mxu0 0
        %777 = vmatprep.subr.bf16.mxu0 0
        %778 = vmatpush2.bf16.msra.mxu0 0
        %779 = vmatprep.mubr.bf16.mxu0 0
        %780 = vmatmul.mubr.bf16.gmra.mxu0 %v745
        %v781 = vpop.f32.mrf.mxu0
        %v782 = vadd.f32 %v724, %v781
        %v783 = vpop.f32.mrf.mxu0
        %v784 = vpop.f32.mrf.mxu0
        %v785 = vpop.f32.mrf.mxu0
        %786 = vdwg.mxu0
        %vm787 = vmpackc.low %vm654, %vm654
        %v788 = vsel %vm787, 65537, 0
        %789 = vrot.lane.b32.xlu0 %v788, 17
        %v790 = vpop.permute.xlu0 %789
        %v791 = vrot.slane %v790, 4
        %vm792 = vcmask 138240
        %v793 = vsel %vm792, %v791, %v790
        %vm794 = vcmp.ne.s16.totalorder %v793, 0
        %v795 = vsel %vm794, %v655, 0
        %v796 = vsel %vm794, %v656, 0
        %s797 = scalar_lea.vmem %s6, 4
        %v798 = vld [vmem:[%s797] sm:$0x3]
        %v801 = vunpack.c.l.b16 %v795
        %v802 = vunpack.c.h.b16 %v795
        %v803 = vunpack.c.l.b16 %v796
        %v804 = vunpack.c.h.b16 %v796
        %v805 = vpack.c.b16 %v803, %v801
        %v806 = vpack.c.b16 %v804, %v802
        %807 = vrot.lane.b32.xlu0 %v805, 111
        %v808 = vpop.permute.xlu0 %807
        %809 = vrot.lane.b32.xlu0 %v806, 111
        %v810 = vpop.permute.xlu0 %809
        %vm811 = vcmask 908288
        %v812 = vsel %vm811, %v808, %v810
        %v815 = vsel %vm685, %v798, 0
        %817 = vmatprep.subr.bf16.mxu0 0
        %818 = vmatpush1.bf16.msra.mxu0 0
        %819 = vmatprep.subr.bf16.mxu0 0
        %820 = vmatpush1.bf16.msra.mxu0 0
        %821 = vmatprep.subr.bf16.mxu0 0
        %822 = vmatpush1.bf16.msra.mxu0 0
        %823 = vmatprep.subr.bf16.mxu0 0
        %824 = vmatpush1.bf16.msra.mxu0 0
        %825 = vmatprep.subr.bf16.mxu0 0
        %826 = vmatpush1.bf16.msra.mxu0 0
        %827 = vmatprep.subr.bf16.mxu0 0
        %828 = vmatpush1.bf16.msra.mxu0 0
        %829 = vmatprep.subr.bf16.mxu0 0
        %830 = vmatpush1.bf16.msra.mxu0 0
        %831 = vmatprep.subr.bf16.mxu0 0
        %832 = vmatpush1.bf16.msra.mxu0 %v812
        %833 = vmatprep.subr.bf16.mxu0 0
        %834 = vmatpush2.bf16.msra.mxu0 0
        %835 = vmatprep.subr.bf16.mxu0 0
        %836 = vmatpush2.bf16.msra.mxu0 0
        %837 = vmatprep.subr.bf16.mxu0 0
        %838 = vmatpush2.bf16.msra.mxu0 0
        %839 = vmatprep.subr.bf16.mxu0 0
        %840 = vmatpush2.bf16.msra.mxu0 0
        %841 = vmatprep.subr.bf16.mxu0 0
        %842 = vmatpush2.bf16.msra.mxu0 0
        %843 = vmatprep.subr.bf16.mxu0 0
        %844 = vmatpush2.bf16.msra.mxu0 0
        %845 = vmatprep.subr.bf16.mxu0 0
        %846 = vmatpush2.bf16.msra.mxu0 0
        %847 = vmatprep.subr.bf16.mxu0 0
        %848 = vmatpush2.bf16.msra.mxu0 0
        %849 = vmatprep.mubr.bf16.mxu0 0
        %850 = vmatmul.mubr.bf16.gmra.mxu0 %v815
        %v851 = vpop.f32.mrf.mxu0
        %v852 = vadd.f32 0.0, %v851
        %v853 = vpop.f32.mrf.mxu0
        %v854 = vpop.f32.mrf.mxu0
        %v855 = vpop.f32.mrf.mxu0
        %856 = vdwg.mxu0
        %v857 = vadd.f32 %v782, %v852
        %858 = vrot.lane.b32.xlu0 %v658, 31
        %v859 = vpop.permute.xlu0 %858
        %v860 = vrot.slane %v859, 4
        %vm861 = vcmask 252928
        %v862 = vsel %vm861, %v860, %v859
        %vm863 = vcmp.ne.s16.totalorder %v862, 0
        %v864 = vsel %vm863, %v655, 0
        %v865 = vsel %vm863, %v656, 0
        %s866 = scalar_lea.vmem %s6, 6
        %v867 = vld [vmem:[%s866] sm:$0x3]
        %v870 = vunpack.c.l.b16 %v864
        %v871 = vunpack.c.h.b16 %v864
        %v872 = vunpack.c.l.b16 %v865
        %v873 = vunpack.c.h.b16 %v865
        %v874 = vpack.c.b16 %v872, %v870
        %v875 = vpack.c.b16 %v873, %v871
        %876 = vrot.lane.b32.xlu0 %v874, 97
        %v877 = vpop.permute.xlu0 %876
        %878 = vrot.lane.b32.xlu0 %v875, 97
        %v879 = vpop.permute.xlu0 %878
        %vm880 = vcmask 793600
        %v881 = vsel %vm880, %v877, %v879
        %v884 = vsel %vm685, %v867, 0
        %886 = vmatprep.subr.bf16.mxu0 0
        %887 = vmatpush1.bf16.msra.mxu0 0
        %888 = vmatprep.subr.bf16.mxu0 0
        %889 = vmatpush1.bf16.msra.mxu0 0
        %890 = vmatprep.subr.bf16.mxu0 0
        %891 = vmatpush1.bf16.msra.mxu0 0
        %892 = vmatprep.subr.bf16.mxu0 0
        %893 = vmatpush1.bf16.msra.mxu0 0
        %894 = vmatprep.subr.bf16.mxu0 0
        %895 = vmatpush1.bf16.msra.mxu0 0
        %896 = vmatprep.subr.bf16.mxu0 0
        %897 = vmatpush1.bf16.msra.mxu0 0
        %898 = vmatprep.subr.bf16.mxu0 0
        %899 = vmatpush1.bf16.msra.mxu0 0
        %900 = vmatprep.subr.bf16.mxu0 0
        %901 = vmatpush1.bf16.msra.mxu0 %v881
        %902 = vmatprep.subr.bf16.mxu0 0
        %903 = vmatpush2.bf16.msra.mxu0 0
        %904 = vmatprep.subr.bf16.mxu0 0
        %905 = vmatpush2.bf16.msra.mxu0 0
        %906 = vmatprep.subr.bf16.mxu0 0
        %907 = vmatpush2.bf16.msra.mxu0 0
        %908 = vmatprep.subr.bf16.mxu0 0
        %909 = vmatpush2.bf16.msra.mxu0 0
        %910 = vmatprep.subr.bf16.mxu0 0
        %911 = vmatpush2.bf16.msra.mxu0 0
        %912 = vmatprep.subr.bf16.mxu0 0
        %913 = vmatpush2.bf16.msra.mxu0 0
        %914 = vmatprep.subr.bf16.mxu0 0
        %915 = vmatpush2.bf16.msra.mxu0 0
        %916 = vmatprep.subr.bf16.mxu0 0
        %917 = vmatpush2.bf16.msra.mxu0 0
        %918 = vmatprep.mubr.bf16.mxu0 0
        %919 = vmatmul.mubr.bf16.gmra.mxu0 %v884
        %v920 = vpop.f32.mrf.mxu0
        %v921 = vadd.f32 0.0, %v920
        %v922 = vpop.f32.mrf.mxu0
        %v923 = vpop.f32.mrf.mxu0
        %v924 = vpop.f32.mrf.mxu0
        %925 = vdwg.mxu0
        %v926 = vadd.f32 %v857, %v921
        %s927 = scalar_lea.vmem %s6, 8
        %v928 = vld [vmem:[%s927] sm:$0x3]
        %929 = vrot.lane.b32.xlu0 %v676, 96
        %v930 = vpop.permute.xlu0 %929
        %931 = vrot.lane.b32.xlu0 %v677, 96
        %v932 = vpop.permute.xlu0 %931
        %vm933 = vcmask 785408
        %v934 = vsel %vm933, %v930, %v932
        %v937 = vsel %vm685, %v928, 0
        %939 = vmatprep.subr.bf16.mxu0 0
        %940 = vmatpush1.bf16.msra.mxu0 0
        %941 = vmatprep.subr.bf16.mxu0 0
        %942 = vmatpush1.bf16.msra.mxu0 0
        %943 = vmatprep.subr.bf16.mxu0 0
        %944 = vmatpush1.bf16.msra.mxu0 0
        %945 = vmatprep.subr.bf16.mxu0 0
        %946 = vmatpush1.bf16.msra.mxu0 0
        %947 = vmatprep.subr.bf16.mxu0 0
        %948 = vmatpush1.bf16.msra.mxu0 0
        %949 = vmatprep.subr.bf16.mxu0 0
        %950 = vmatpush1.bf16.msra.mxu0 0
        %951 = vmatprep.subr.bf16.mxu0 0
        %952 = vmatpush1.bf16.msra.mxu0 0
        %953 = vmatprep.subr.bf16.mxu0 0
        %954 = vmatpush1.bf16.msra.mxu0 %v934
        %955 = vmatprep.subr.bf16.mxu0 0
        %956 = vmatpush2.bf16.msra.mxu0 0
        %957 = vmatprep.subr.bf16.mxu0 0
        %958 = vmatpush2.bf16.msra.mxu0 0
        %959 = vmatprep.subr.bf16.mxu0 0
        %960 = vmatpush2.bf16.msra.mxu0 0
        %961 = vmatprep.subr.bf16.mxu0 0
        %962 = vmatpush2.bf16.msra.mxu0 0
        %963 = vmatprep.subr.bf16.mxu0 0
        %964 = vmatpush2.bf16.msra.mxu0 0
        %965 = vmatprep.subr.bf16.mxu0 0
        %966 = vmatpush2.bf16.msra.mxu0 0
        %967 = vmatprep.subr.bf16.mxu0 0
        %968 = vmatpush2.bf16.msra.mxu0 0
        %969 = vmatprep.subr.bf16.mxu0 0
        %970 = vmatpush2.bf16.msra.mxu0 0
        %971 = vmatprep.mubr.bf16.mxu0 0
        %972 = vmatmul.mubr.bf16.gmra.mxu0 %v937
        %v973 = vpop.f32.mrf.mxu0
        %v974 = vadd.f32 0.0, %v973
        %v975 = vpop.f32.mrf.mxu0
        %v976 = vpop.f32.mrf.mxu0
        %v977 = vpop.f32.mrf.mxu0
        %978 = vdwg.mxu0
        %v979 = vadd.f32 %v926, %v974
        %980 = vrot.lane.b32.xlu0 %v788, 33
        %v981 = vpop.permute.xlu0 %980
        %v982 = vrot.slane %v981, 4
        %vm983 = vcmask 269312
        %v984 = vsel %vm983, %v982, %v981
        %vm985 = vcmp.ne.s16.totalorder %v984, 0
        %v986 = vsel %vm985, %v655, 0
        %v987 = vsel %vm985, %v656, 0
        %s988 = scalar_lea.vmem %s6, 10
        %v989 = vld [vmem:[%s988] sm:$0x3]
        %v992 = vunpack.c.l.b16 %v986
        %v993 = vunpack.c.h.b16 %v986
        %v994 = vunpack.c.l.b16 %v987
        %v995 = vunpack.c.h.b16 %v987
        %v996 = vpack.c.b16 %v994, %v992
        %v997 = vpack.c.b16 %v995, %v993
        %998 = vrot.lane.b32.xlu0 %v996, 95
        %v999 = vpop.permute.xlu0 %998
        %1000 = vrot.lane.b32.xlu0 %v997, 95
        %v1001 = vpop.permute.xlu0 %1000
        %vm1002 = vcmask 777216
        %v1003 = vsel %vm1002, %v999, %v1001
        %v1006 = vsel %vm685, %v989, 0
        %1008 = vmatprep.subr.bf16.mxu0 0
        %1009 = vmatpush1.bf16.msra.mxu0 0
        %1010 = vmatprep.subr.bf16.mxu0 0
        %1011 = vmatpush1.bf16.msra.mxu0 0
        %1012 = vmatprep.subr.bf16.mxu0 0
        %1013 = vmatpush1.bf16.msra.mxu0 0
        %1014 = vmatprep.subr.bf16.mxu0 0
        %1015 = vmatpush1.bf16.msra.mxu0 0
        %1016 = vmatprep.subr.bf16.mxu0 0
        %1017 = vmatpush1.bf16.msra.mxu0 0
        %1018 = vmatprep.subr.bf16.mxu0 0
        %1019 = vmatpush1.bf16.msra.mxu0 0
        %1020 = vmatprep.subr.bf16.mxu0 0
        %1021 = vmatpush1.bf16.msra.mxu0 0
        %1022 = vmatprep.subr.bf16.mxu0 0
        %1023 = vmatpush1.bf16.msra.mxu0 %v1003
        %1024 = vmatprep.subr.bf16.mxu0 0
        %1025 = vmatpush2.bf16.msra.mxu0 0
        %1026 = vmatprep.subr.bf16.mxu0 0
        %1027 = vmatpush2.bf16.msra.mxu0 0
        %1028 = vmatprep.subr.bf16.mxu0 0
        %1029 = vmatpush2.bf16.msra.mxu0 0
        %1030 = vmatprep.subr.bf16.mxu0 0
        %1031 = vmatpush2.bf16.msra.mxu0 0
        %1032 = vmatprep.subr.bf16.mxu0 0
        %1033 = vmatpush2.bf16.msra.mxu0 0
        %1034 = vmatprep.subr.bf16.mxu0 0
        %1035 = vmatpush2.bf16.msra.mxu0 0
        %1036 = vmatprep.subr.bf16.mxu0 0
        %1037 = vmatpush2.bf16.msra.mxu0 0
        %1038 = vmatprep.subr.bf16.mxu0 0
        %1039 = vmatpush2.bf16.msra.mxu0 0
        %1040 = vmatprep.mubr.bf16.mxu0 0
        %1041 = vmatmul.mubr.bf16.gmra.mxu0 %v1006
        %v1042 = vpop.f32.mrf.mxu0
        %v1043 = vadd.f32 0.0, %v1042
        %v1044 = vpop.f32.mrf.mxu0
        %v1045 = vpop.f32.mrf.mxu0
        %v1046 = vpop.f32.mrf.mxu0
        %1047 = vdwg.mxu0
        %v1048 = vadd.f32 %v979, %v1043
        %1049 = vrot.lane.b32.xlu0 %v658, 47
        %v1050 = vpop.permute.xlu0 %1049
        %v1051 = vrot.slane %v1050, 4
        %vm1052 = vcmask 384000
        %v1053 = vsel %vm1052, %v1051, %v1050
        %vm1054 = vcmp.ne.s16.totalorder %v1053, 0
        %v1055 = vsel %vm1054, %v655, 0
        %v1056 = vsel %vm1054, %v656, 0
        %s1057 = scalar_lea.vmem %s6, 12
        %v1058 = vld [vmem:[%s1057] sm:$0x3]
        %v1061 = vunpack.c.l.b16 %v1055
        %v1062 = vunpack.c.h.b16 %v1055
        %v1063 = vunpack.c.l.b16 %v1056
        %v1064 = vunpack.c.h.b16 %v1056
        %v1065 = vpack.c.b16 %v1063, %v1061
        %v1066 = vpack.c.b16 %v1064, %v1062
        %1067 = vrot.lane.b32.xlu0 %v1065, 81
        %v1068 = vpop.permute.xlu0 %1067
        %1069 = vrot.lane.b32.xlu0 %v1066, 81
        %v1070 = vpop.permute.xlu0 %1069
        %vm1071 = vcmask 662528
        %v1072 = vsel %vm1071, %v1068, %v1070
        %v1075 = vsel %vm685, %v1058, 0
        %1077 = vmatprep.subr.bf16.mxu0 0
        %1078 = vmatpush1.bf16.msra.mxu0 0
        %1079 = vmatprep.subr.bf16.mxu0 0
        %1080 = vmatpush1.bf16.msra.mxu0 0
        %1081 = vmatprep.subr.bf16.mxu0 0
        %1082 = vmatpush1.bf16.msra.mxu0 0
        %1083 = vmatprep.subr.bf16.mxu0 0
        %1084 = vmatpush1.bf16.msra.mxu0 0
        %1085 = vmatprep.subr.bf16.mxu0 0
        %1086 = vmatpush1.bf16.msra.mxu0 0
        %1087 = vmatprep.subr.bf16.mxu0 0
        %1088 = vmatpush1.bf16.msra.mxu0 0
        %1089 = vmatprep.subr.bf16.mxu0 0
        %1090 = vmatpush1.bf16.msra.mxu0 0
        %1091 = vmatprep.subr.bf16.mxu0 0
        %1092 = vmatpush1.bf16.msra.mxu0 %v1072
        %1093 = vmatprep.subr.bf16.mxu0 0
        %1094 = vmatpush2.bf16.msra.mxu0 0
        %1095 = vmatprep.subr.bf16.mxu0 0
        %1096 = vmatpush2.bf16.msra.mxu0 0
        %1097 = vmatprep.subr.bf16.mxu0 0
        %1098 = vmatpush2.bf16.msra.mxu0 0
        %1099 = vmatprep.subr.bf16.mxu0 0
        %1100 = vmatpush2.bf16.msra.mxu0 0
        %1101 = vmatprep.subr.bf16.mxu0 0
        %1102 = vmatpush2.bf16.msra.mxu0 0
        %1103 = vmatprep.subr.bf16.mxu0 0
        %1104 = vmatpush2.bf16.msra.mxu0 0
        %1105 = vmatprep.subr.bf16.mxu0 0
        %1106 = vmatpush2.bf16.msra.mxu0 0
        %1107 = vmatprep.subr.bf16.mxu0 0
        %1108 = vmatpush2.bf16.msra.mxu0 0
        %1109 = vmatprep.mubr.bf16.mxu0 0
        %1110 = vmatmul.mubr.bf16.gmra.mxu0 %v1075
        %v1111 = vpop.f32.mrf.mxu0
        %v1112 = vadd.f32 0.0, %v1111
        %v1113 = vpop.f32.mrf.mxu0
        %v1114 = vpop.f32.mrf.mxu0
        %v1115 = vpop.f32.mrf.mxu0
        %1116 = vdwg.mxu0
        %v1117 = vadd.f32 %v1048, %v1112
        %s1118 = scalar_lea.vmem %s6, 14
        %v1119 = vld [vmem:[%s1118] sm:$0x3]
        %1120 = vrot.lane.b32.xlu0 %v676, 80
        %v1121 = vpop.permute.xlu0 %1120
        %1122 = vrot.lane.b32.xlu0 %v677, 80
        %v1123 = vpop.permute.xlu0 %1122
        %vm1124 = vcmask 654336
        %v1125 = vsel %vm1124, %v1121, %v1123
        %v1128 = vsel %vm685, %v1119, 0
        %1130 = vmatprep.subr.bf16.mxu0 0
        %1131 = vmatpush1.bf16.msra.mxu0 0
        %1132 = vmatprep.subr.bf16.mxu0 0
        %1133 = vmatpush1.bf16.msra.mxu0 0
        %1134 = vmatprep.subr.bf16.mxu0 0
        %1135 = vmatpush1.bf16.msra.mxu0 0
        %1136 = vmatprep.subr.bf16.mxu0 0
        %1137 = vmatpush1.bf16.msra.mxu0 0
        %1138 = vmatprep.subr.bf16.mxu0 0
        %1139 = vmatpush1.bf16.msra.mxu0 0
        %1140 = vmatprep.subr.bf16.mxu0 0
        %1141 = vmatpush1.bf16.msra.mxu0 0
        %1142 = vmatprep.subr.bf16.mxu0 0
        %1143 = vmatpush1.bf16.msra.mxu0 0
        %1144 = vmatprep.subr.bf16.mxu0 0
        %1145 = vmatpush1.bf16.msra.mxu0 %v1125
        %1146 = vmatprep.subr.bf16.mxu0 0
        %1147 = vmatpush2.bf16.msra.mxu0 0
        %1148 = vmatprep.subr.bf16.mxu0 0
        %1149 = vmatpush2.bf16.msra.mxu0 0
        %1150 = vmatprep.subr.bf16.mxu0 0
        %1151 = vmatpush2.bf16.msra.mxu0 0
        %1152 = vmatprep.subr.bf16.mxu0 0
        %1153 = vmatpush2.bf16.msra.mxu0 0
        %1154 = vmatprep.subr.bf16.mxu0 0
        %1155 = vmatpush2.bf16.msra.mxu0 0
        %1156 = vmatprep.subr.bf16.mxu0 0
        %1157 = vmatpush2.bf16.msra.mxu0 0
        %1158 = vmatprep.subr.bf16.mxu0 0
        %1159 = vmatpush2.bf16.msra.mxu0 0
        %1160 = vmatprep.subr.bf16.mxu0 0
        %1161 = vmatpush2.bf16.msra.mxu0 0
        %1162 = vmatprep.mubr.bf16.mxu0 0
        %1163 = vmatmul.mubr.bf16.gmra.mxu0 %v1128
        %v1164 = vpop.f32.mrf.mxu0
        %v1165 = vadd.f32 0.0, %v1164
        %v1166 = vpop.f32.mrf.mxu0
        %v1167 = vpop.f32.mrf.mxu0
        %v1168 = vpop.f32.mrf.mxu0
        %1169 = vdwg.mxu0
        %v1170 = vadd.f32 %v1117, %v1165
        %1171 = vrot.lane.b32.xlu0 %v788, 49
        %v1172 = vpop.permute.xlu0 %1171
        %v1173 = vrot.slane %v1172, 4
        %vm1174 = vcmask 400384
        %v1175 = vsel %vm1174, %v1173, %v1172
        %vm1176 = vcmp.ne.s16.totalorder %v1175, 0
        %v1177 = vsel %vm1176, %v655, 0
        %v1178 = vsel %vm1176, %v656, 0
        %s1179 = scalar_lea.vmem %s6, 16
        %v1180 = vld [vmem:[%s1179] sm:$0x3]
        %v1183 = vunpack.c.l.b16 %v1177
        %v1184 = vunpack.c.h.b16 %v1177
        %v1185 = vunpack.c.l.b16 %v1178
        %v1186 = vunpack.c.h.b16 %v1178
        %v1187 = vpack.c.b16 %v1185, %v1183
        %v1188 = vpack.c.b16 %v1186, %v1184
        %1189 = vrot.lane.b32.xlu0 %v1187, 79
        %v1190 = vpop.permute.xlu0 %1189
        %1191 = vrot.lane.b32.xlu0 %v1188, 79
        %v1192 = vpop.permute.xlu0 %1191
        %vm1193 = vcmask 646144
        %v1194 = vsel %vm1193, %v1190, %v1192
        %v1197 = vsel %vm685, %v1180, 0
        %1199 = vmatprep.subr.bf16.mxu0 0
        %1200 = vmatpush1.bf16.msra.mxu0 0
        %1201 = vmatprep.subr.bf16.mxu0 0
        %1202 = vmatpush1.bf16.msra.mxu0 0
        %1203 = vmatprep.subr.bf16.mxu0 0
        %1204 = vmatpush1.bf16.msra.mxu0 0
        %1205 = vmatprep.subr.bf16.mxu0 0
        %1206 = vmatpush1.bf16.msra.mxu0 0
        %1207 = vmatprep.subr.bf16.mxu0 0
        %1208 = vmatpush1.bf16.msra.mxu0 0
        %1209 = vmatprep.subr.bf16.mxu0 0
        %1210 = vmatpush1.bf16.msra.mxu0 0
        %1211 = vmatprep.subr.bf16.mxu0 0
        %1212 = vmatpush1.bf16.msra.mxu0 0
        %1213 = vmatprep.subr.bf16.mxu0 0
        %1214 = vmatpush1.bf16.msra.mxu0 %v1194
        %1215 = vmatprep.subr.bf16.mxu0 0
        %1216 = vmatpush2.bf16.msra.mxu0 0
        %1217 = vmatprep.subr.bf16.mxu0 0
        %1218 = vmatpush2.bf16.msra.mxu0 0
        %1219 = vmatprep.subr.bf16.mxu0 0
        %1220 = vmatpush2.bf16.msra.mxu0 0
        %1221 = vmatprep.subr.bf16.mxu0 0
        %1222 = vmatpush2.bf16.msra.mxu0 0
        %1223 = vmatprep.subr.bf16.mxu0 0
        %1224 = vmatpush2.bf16.msra.mxu0 0
        %1225 = vmatprep.subr.bf16.mxu0 0
        %1226 = vmatpush2.bf16.msra.mxu0 0
        %1227 = vmatprep.subr.bf16.mxu0 0
        %1228 = vmatpush2.bf16.msra.mxu0 0
        %1229 = vmatprep.subr.bf16.mxu0 0
        %1230 = vmatpush2.bf16.msra.mxu0 0
        %1231 = vmatprep.mubr.bf16.mxu0 0
        %1232 = vmatmul.mubr.bf16.gmra.mxu0 %v1197
        %v1233 = vpop.f32.mrf.mxu0
        %v1234 = vadd.f32 0.0, %v1233
        %v1235 = vpop.f32.mrf.mxu0
        %v1236 = vpop.f32.mrf.mxu0
        %v1237 = vpop.f32.mrf.mxu0
        %1238 = vdwg.mxu0
        %v1239 = vadd.f32 %v1170, %v1234
        %v1240 = vld [vmem:[%s7] sm:$0xf]
        %1242 = vset.pattern.permute.xlu0 0
        %1243 = vperm.xlu0 %1242, %v1240
        %v1244 = vpop.permute.xlu0 %1243
        %v1246 = vadd.f32 %v1239, %v1244
        %v1247 = vld [vmem:[%s479] sm:$0xf]
        %1248 = vst [vmem:[%s517] sm:$0xf] %v1247
        %1249 = vst [vmem:[%s517 + $0x4] sm:$0xf] %v1246
        %p1250 = scmp.lt.s32.totalorder %s23, 1
        %s1251 = scalar_select %p1250, %s23, 1
        %p1252 = scmp.lt.s32.totalorder %s24, 1
        %s1253 = scalar_select %p1252, %s24, 1
        %s1254 = smul.addr %s1251, 2
        %s1255 = sadd.s32 %s1253, %s1254
        %s1256 = smul.addr %s1255, 8
        %s1257 = scalar_lea.vmem %s8, %s1256
        // Predicated region
        $region94: #{_lambda_.3} parent=88 // pred_check
          %p1258 = pneg %p259
        $region95: #{_lambda_.3} parent=88 // pred_check_branch
          %1260 = sbr.rel (%p1258) target = $region97
        $region96: #{_lambda_.3} parent=88 // pred_region
          _
        $region97: #{_lambda_.3} parent=88 // pred_fallthru
          _
      $region89: #{_lambda_.3} parent=5 // pred_fallthru
        _
      %p1261 = scmp.le.s32.totalorder 2, %s14
      // Predicated region
      $region98: #{_lambda_.3} parent=5 // pred_check
        %p1262 = pneg %p1261
      $region99: #{_lambda_.3} parent=5 // pred_check_branch
        %1264 = sbr.rel (%p1262) target = $region101
      $region100: #{_lambda_.3} parent=5 // pred_region
        %s1265 = ssub.s32 %s14, 2
        // Predicated region
        $region102: #{_lambda_.3} parent=100 // pred_check
          %p1266 = pneg %p265
        $region103: #{_lambda_.3} parent=100 // pred_check_branch
          %1268 = sbr.rel (%p1266) target = $region105
        $region104: #{_lambda_.3} parent=100 // pred_region
          %p1269 = scmp.lt.s32.totalorder %s25, 1
          %s1270 = scalar_select %p1269, %s25, 1
          %p1271 = scmp.lt.s32.totalorder %s26, 1
          %s1272 = scalar_select %p1271, %s26, 1
          %s1273 = smul.addr %s1270, 2
          %s1274 = sadd.s32 %s1272, %s1273
          %s1275 = smul.addr %s1274, 8
          %s1276 = scalar_lea.vmem %s8, %s1275
        $region105: #{_lambda_.3} parent=100 // pred_fallthru
          _
      $region101: #{_lambda_.3} parent=5 // pred_fallthru
        _
    $region6: #{_lambda_.3} parent=1 // loop_footer
      %s18 = sadd.s32 1, %s14
    $region7: #{_lambda_.3} parent=1 // loop_footer_branch
      %13 = sbr.rel target = $region3
    $region8: #{_lambda_.3} parent=1 // loop_exit
      _

</llo_original>
